<compile_context>
chip_gen: v5e
topology: v5e:2x2
jax: 0.10.0
libtpu: 0.0.40
codegen_flags: <defaults>
</compile_context>

<pallas_src>
import math
import numpy as np
import jax
import jax.numpy as jnp
from jax.experimental import pallas as pl
from jax.experimental.pallas import tpu as pltpu


def attention_pooling_kernel(x_ref, pe_ref, wp_ref, we_ref, be_ref, wf_ref, bf_ref, o_ref):
    # x_ref  : (Bt, S, Dp)  batch tile of token features (input dtype), Dp lane-padded
    # pe_ref : (S, Dp)      positional encoding table (first S rows), f32, zero-padded lanes
    # wp_ref : (Dp, L)      pooling-head weights (one column per head, bias=False)
    # we_ref : (Dp, Dq)     shared encoder weight (transposed), be_ref: (1, Dq) bias
    # wf_ref : (L*Dq, O)    final classifier weight (transposed), zero-padded to O=128 lanes
    # bf_ref : (1, O)       classifier bias (zero-padded)
    # o_ref  : (Bt, O)      output logits tile (columns >= 2 are zero padding)
    Bt, S, Dp = x_ref.shape
    L = wp_ref.shape[1]
    Dq = we_ref.shape[1]
    O = wf_ref.shape[1]

    # Positional-encoding add in f32 (precision), then feed the MXU in the
    # input dtype: bf16 inputs stay bf16 (full-rate MXU), f32 stays f32.
    low_precision = np.dtype(x_ref.dtype).itemsize < 4
    x_f = x_ref[...].astype(jnp.float32) + pe_ref[...][None]              # (Bt, S, Dp) f32
    x_mm = x_f.astype(x_ref.dtype) if low_precision else x_f

    # --- Attention scores: one collapsed matmul. wp is the constant MXU RHS,
    # M = Bt*S rows are streamed (no per-batch weight reloads, no M=3 pushes). ---
    s = jnp.dot(x_mm.reshape(Bt * S, Dp), wp_ref[...].astype(x_mm.dtype),
                preferred_element_type=jnp.float32)                        # (Bt*S, L)
    s = s.reshape(Bt, S, L)                                                # softmax over S

    # Numerically stable softmax over the token axis; EXACT divide (the approx
    # reciprocal previously pushed the result outside the 5e-4 tolerance).
    s = s - jnp.max(s, axis=1, keepdims=True)
    p = jnp.exp(s)
    attn = p / jnp.sum(p, axis=1, keepdims=True)                           # (Bt, S, L)

    # --- Attended features: L (=3) is far below MXU granularity, so do the
    # weighted sum on the VPU (broadcast attn over the D lanes, reduce over S). ---
    att_list = []
    for l in range(L):                                   # static, unrolled (L == 3)
        w_l = attn[:, :, l:l + 1]                        # (Bt, S, 1)
        att_list.append(jnp.sum(w_l * x_f, axis=1))      # (Bt, Dp) f32
    attended = jnp.concatenate(att_list, axis=0)         # (L*Bt, Dp), head-major rows

    # --- Shared encoder (Linear + ReLU): single matmul with M = L*Bt. ---
    enc = jnp.dot(attended, we_ref[...],
                  preferred_element_type=jnp.float32) + be_ref[...]        # (L*Bt, Dq)
    enc = jnp.maximum(enc, 0.0)

    # --- Final classifier: column-stack of per-head encodings @ wf
    #     == sum over heads of enc_l @ wf_l. Kept as L tiny matmuls to avoid a
    #     lane-dim-changing reshape; Bt is a multiple of 8 so slices are aligned. ---
    out = jnp.zeros((Bt, O), jnp.float32)
    for l in range(L):                                   # static, unrolled
        out = out + jnp.dot(enc[l * Bt:(l + 1) * Bt, :],
                            wf_ref[l * Dq:(l + 1) * Dq, :],
                            preferred_element_type=jnp.float32)            # (Bt, O)
    o_ref[...] = (out + bf_ref[...]).astype(o_ref.dtype)


def make_positional_encoding(max_len, d_model):
    position = jnp.arange(max_len, dtype=jnp.float32)[:, None]
    div_term = jnp.exp(jnp.arange(0, d_model, 2, dtype=jnp.float32)
                       * (-math.log(10000.0) / d_model))
    pe = jnp.zeros((max_len, d_model), dtype=jnp.float32)
    pe = pe.at[:, 0::2].set(jnp.sin(position * div_term))
    pe = pe.at[:, 1::2].set(jnp.cos(position * div_term))
    return pe


def init_params(key, num_features, num_layers, num_segments, height):
    D = num_features
    Dq = D // 4
    L = num_layers
    max_len = num_segments * height * height
    k1, k2, k3, k4, k5 = jax.random.split(key, 5)
    params = {
        "pe": make_positional_encoding(max_len, D),                  # (max_len, D)
        "wp": 0.1 * jax.random.normal(k1, (D, L), jnp.float32),      # pooling heads (bias=False)
        "we": 0.1 * jax.random.normal(k2, (D, Dq), jnp.float32),     # encoder weight^T
        "be": 0.1 * jax.random.normal(k3, (1, Dq), jnp.float32),     # encoder bias
        "wf": 0.1 * jax.random.normal(k4, (L * Dq, 2), jnp.float32), # classifier weight^T
        "bf": 0.1 * jax.random.normal(k5, (1, 2), jnp.float32),      # classifier bias
    }
    return params


def attention_pooling_forward(features, params, *, num_segments, num_features):
    nt, chw = features.shape
    h = int(round((chw / num_features) ** 0.5))
    assert h * h * num_features == chw, "AttentionPooling expects square feature maps (h == w)"
    S = num_segments * h * h
    D = num_features
    x = features.reshape(-1, S, D)            # keep input dtype; pe add / casts happen in-kernel
    B = x.shape[0]

    L = params["wp"].shape[1]
    Dq = params["we"].shape[1]
    O = 128                                    # lane-dense output block; logits in cols 0..1

    # --- Lane-pad the feature dim to a multiple of 128 (zero padding => exact). ---
    Dp = ((D + 127) // 128) * 128
    pad_d = Dp - D
    if pad_d:
        x = jnp.pad(x, ((0, 0), (0, 0), (0, pad_d)))
    pe = params["pe"][:S]
    if pad_d:
        pe = jnp.pad(pe, ((0, 0), (0, pad_d)))
        wp = jnp.pad(params["wp"], ((0, pad_d), (0, 0)))
        we = jnp.pad(params["we"], ((0, pad_d), (0, 0)))
    else:
        wp, we = params["wp"], params["we"]
    be = params["be"]
    wf = jnp.zeros((L * Dq, O), jnp.float32).at[:, :2].set(params["wf"])
    bf = jnp.zeros((1, O), jnp.float32).at[:, :2].set(params["bf"])
    # TODO(synk): for bf16 deployments keep pe/wp/we resident in bf16 to shrink the
    # VMEM-resident constants (most binding on v7x's 64 MiB VMEM).

    # --- Batch tile size from the VMEM budget: double-buffered x tile plus the
    # in-kernel f32 temporaries; conservative for v5e's 16 MiB scoped default. ---
    itemsize = np.dtype(x.dtype).itemsize
    per_row_bytes = S * Dp * (2 * itemsize + 3 * 4)   # 2x input (dbl-buffer) + ~3 f32 temps
    budget = 10 << 20
    Bt_cap = int(budget // max(per_row_bytes, 1))
    Bt_cap = max(8, min(512, (Bt_cap // 8) * 8))
    if B <= Bt_cap:
        # Small batch: one tile; for moderate batches split in two so both v7x
        # TensorCores (grid axis is "parallel") get work.
        Bt = B if B < 16 else (B + 1) // 2
    else:
        Bt = Bt_cap
    Bt = max(8, ((Bt + 7) // 8) * 8)                  # sublane-aligned batch tile
    B_pad = ((B + Bt - 1) // Bt) * Bt
    nb = B_pad // Bt
    if B_pad != B:
        x = jnp.pad(x, ((0, B_pad - B), (0, 0), (0, 0)))

    weight_bytes = 4 * (pe.size + wp.size + we.size + be.size + wf.size + bf.size)
    vmem_limit = int(Bt * per_row_bytes + weight_bytes + 2 * Bt * O * 4 + (4 << 20))
    vmem_limit = max(16 << 20, min(vmem_limit, 48 << 20))

    # Advisory cost so XLA can overlap this (cheap) custom call with neighbors.
    flops = int(B_pad * (2 * S * Dp * L      # score matmul
                         + 2 * S * Dp * L    # attended weighted sum
                         + 2 * Dp * Dq * L   # shared encoder
                         + 2 * Dq * O * L    # final classifier
                         + 6 * S * L))       # softmax elementwise
    transcendentals = int(B_pad * S * L)
    bytes_accessed = int(B_pad * S * Dp * itemsize + weight_bytes + B_pad * O * 4)

    out = pl.pallas_call(
        attention_pooling_kernel,
        out_shape=jax.ShapeDtypeStruct((B_pad, O), jnp.float32),
        grid_spec=pltpu.PrefetchScalarGridSpec(
            num_scalar_prefetch=0,
            grid=(nb,),
            in_specs=[
                pl.BlockSpec((Bt, S, Dp), lambda b: (b, 0, 0)),   # x: tiled over batch
                pl.BlockSpec((S, Dp), lambda b: (0, 0)),          # pe: VMEM-resident
                pl.BlockSpec((Dp, L), lambda b: (0, 0)),          # wp
                pl.BlockSpec((Dp, Dq), lambda b: (0, 0)),         # we
                pl.BlockSpec((1, Dq), lambda b: (0, 0)),          # be
                pl.BlockSpec((L * Dq, O), lambda b: (0, 0)),      # wf (lane-padded)
                pl.BlockSpec((1, O), lambda b: (0, 0)),           # bf (lane-padded)
            ],
            out_specs=pl.BlockSpec((Bt, O), lambda b: (b, 0)),
        ),
        compiler_params=pltpu.CompilerParams(
            dimension_semantics=("parallel",),
            vmem_limit_bytes=vmem_limit),
        cost_estimate=pl.CostEstimate(flops=flops,
                                      transcendentals=transcendentals,
                                      bytes_accessed=bytes_accessed),
    )(x, pe, wp, we, be, wf, bf)
    return out[:B, :2]


def reference_forward(features, params, *, num_segments, num_features):
    # Pure-JAX reference mirroring the PyTorch module (eval mode: dropout = identity).
    nt, chw = features.shape
    h = int(round((chw / num_features) ** 0.5))
    S = num_segments * h * h
    D = num_features
    x = features.reshape(-1, S, D).astype(jnp.float32)
    x = x + params["pe"][:S][None]
    attended = []
    L = params["wp"].shape[1]
    for i in range(L):
        scores = x @ params["wp"][:, i]                      # (B, S)
        w = jax.nn.softmax(scores, axis=-1)                  # (B, S)
        af = jnp.einsum("bs,bsd->bd", w, x)                  # (B, D)
        af = jnp.maximum(af @ params["we"] + params["be"], 0.0)
        attended.append(af)
    final_features = jnp.concatenate(attended, axis=-1)      # (B, L*D/4)
    return final_features @ params["wf"] + params["bf"]      # (B, 2)


if __name__ == "__main__":
    # Small, forward-consistent shapes:
    num_segments = 2      # num_clips
    num_features = 32     # D (hidden_dim)
    num_layers = 3
    height = 4            # spatial h (module default is 7; reshape derives h from input)
    batch = 2
    nt = batch * num_segments
    chw = height * height * num_features   # = 512

    key = jax.random.PRNGKey(0)
    k_feat, k_par = jax.random.split(key)
    features = jax.random.normal(k_feat, (nt, chw), jnp.float32)
    params = init_params(k_par, num_features, num_layers, num_segments, height)

    out = attention_pooling_forward(features, params,
                                    num_segments=num_segments,
                                    num_features=num_features)
    out = jax.block_until_ready(out)

    ref = reference_forward(features, params,
                            num_segments=num_segments,
                            num_features=num_features)
    # Exact softmax divide => differences are only matmul-order / MXU rounding noise.
    np.testing.assert_allclose(np.asarray(out), np.asarray(ref), rtol=5e-4, atol=5e-4)
    print("KERNEL_OK")
</pallas_src>

<mosaic_0001>
module attributes {stable_mosaic.version = 11 : i64} {
  func.func @attention_pooling_kernel(%arg0: i32, %arg1: memref<8x32x128xf32, #tpu.memory_space<vmem>>, %arg2: memref<32x128xf32, #tpu.memory_space<vmem>>, %arg3: memref<128x3xf32, #tpu.memory_space<vmem>>, %arg4: memref<128x8xf32, #tpu.memory_space<vmem>>, %arg5: memref<1x8xf32, #tpu.memory_space<vmem>>, %arg6: memref<24x128xf32, #tpu.memory_space<vmem>>, %arg7: memref<1x128xf32, #tpu.memory_space<vmem>>, %arg8: memref<8x128xf32, #tpu.memory_space<vmem>>) attributes {dimension_semantics = [#tpu.dimension_semantics<parallel>], iteration_bounds = array<i64: 1>, scalar_prefetch = 0 : i64, scratch_operands = 0 : i64, tpu.core_type = #tpu.core_type<tc>, window_params = [{transform_indices = @transform_0, window_bounds = array<i64: 8, 32, 128>}, {pipeline_mode = #tpu.pipeline_mode<synchronous>, transform_indices = @transform_1, window_bounds = array<i64: 32, 128>}, {pipeline_mode = #tpu.pipeline_mode<synchronous>, transform_indices = @transform_2, window_bounds = array<i64: 128, 3>}, {pipeline_mode = #tpu.pipeline_mode<synchronous>, transform_indices = @transform_3, window_bounds = array<i64: 128, 8>}, {pipeline_mode = #tpu.pipeline_mode<synchronous>, transform_indices = @transform_4, window_bounds = array<i64: 1, 8>}, {pipeline_mode = #tpu.pipeline_mode<synchronous>, transform_indices = @transform_5, window_bounds = array<i64: 24, 128>}, {pipeline_mode = #tpu.pipeline_mode<synchronous>, transform_indices = @transform_6, window_bounds = array<i64: 1, 128>}, {transform_indices = @transform_7, window_bounds = array<i64: 8, 128>}]} {
    %c0 = arith.constant 0 : index
    %c0_0 = arith.constant 0 : index
    %c0_1 = arith.constant 0 : index
    %0 = vector.load %arg1[%c0, %c0_0, %c0_1] : memref<8x32x128xf32, #tpu.memory_space<vmem>>, vector<8x32x128xf32>
    %c0_2 = arith.constant 0 : index
    %c0_3 = arith.constant 0 : index
    %1 = vector.load %arg2[%c0_2, %c0_3] : memref<32x128xf32, #tpu.memory_space<vmem>>, vector<32x128xf32>
    %2 = vector.shape_cast %1 : vector<32x128xf32> to vector<1x32x128xf32>
    %3 = vector.broadcast %2 : vector<1x32x128xf32> to vector<8x32x128xf32>
    %4 = arith.addf %0, %3 : vector<8x32x128xf32>
    %5 = vector.shape_cast %4 : vector<8x32x128xf32> to vector<256x128xf32>
    %c0_4 = arith.constant 0 : index
    %c0_5 = arith.constant 0 : index
    %6 = vector.load %arg3[%c0_4, %c0_5] : memref<128x3xf32, #tpu.memory_space<vmem>>, vector<128x3xf32>
    %cst = arith.constant dense<0.000000e+00> : vector<256x3xf32>
    %7 = tpu.matmul %5, %6, %cst {dimension_numbers = #tpu.dot_dimension_numbers<[1], [0], [0], [1], [0, 0, 1, 1], [], []>} : vector<256x128xf32>, vector<128x3xf32>, vector<256x3xf32> -> vector<256x3xf32>
    %8 = vector.shape_cast %7 : vector<256x3xf32> to vector<8x32x3xf32>
    %cst_6 = arith.constant dense<0xFF800000> : vector<8x3xf32>
    %9 = vector.multi_reduction <maximumf>, %8, %cst_6 [1] : vector<8x32x3xf32> to vector<8x3xf32>
    %10 = vector.shape_cast %9 : vector<8x3xf32> to vector<8x1x3xf32>
    %11 = vector.broadcast %10 : vector<8x1x3xf32> to vector<8x32x3xf32>
    %12 = arith.subf %8, %11 : vector<8x32x3xf32>
    %13 = math.exp %12 : vector<8x32x3xf32>
    %cst_7 = arith.constant dense<0.000000e+00> : vector<8x3xf32>
    %14 = vector.multi_reduction <add>, %13, %cst_7 [1] : vector<8x32x3xf32> to vector<8x3xf32>
    %15 = vector.shape_cast %14 : vector<8x3xf32> to vector<8x1x3xf32>
    %16 = vector.broadcast %15 : vector<8x1x3xf32> to vector<8x32x3xf32>
    %17 = arith.divf %13, %16 : vector<8x32x3xf32>
    %18 = vector.extract_strided_slice %17 {offsets = [0, 0, 0], sizes = [8, 32, 1], strides = [1, 1, 1]} : vector<8x32x3xf32> to vector<8x32x1xf32>
    %19 = vector.broadcast %18 : vector<8x32x1xf32> to vector<8x32x128xf32>
    %20 = arith.mulf %19, %4 : vector<8x32x128xf32>
    %cst_8 = arith.constant dense<0.000000e+00> : vector<8x128xf32>
    %21 = vector.multi_reduction <add>, %20, %cst_8 [1] : vector<8x32x128xf32> to vector<8x128xf32>
    %22 = vector.extract_strided_slice %17 {offsets = [0, 0, 1], sizes = [8, 32, 1], strides = [1, 1, 1]} : vector<8x32x3xf32> to vector<8x32x1xf32>
    %23 = vector.broadcast %22 : vector<8x32x1xf32> to vector<8x32x128xf32>
    %24 = arith.mulf %23, %4 : vector<8x32x128xf32>
    %cst_9 = arith.constant dense<0.000000e+00> : vector<8x128xf32>
    %25 = vector.multi_reduction <add>, %24, %cst_9 [1] : vector<8x32x128xf32> to vector<8x128xf32>
    %26 = vector.extract_strided_slice %17 {offsets = [0, 0, 2], sizes = [8, 32, 1], strides = [1, 1, 1]} : vector<8x32x3xf32> to vector<8x32x1xf32>
    %27 = vector.broadcast %26 : vector<8x32x1xf32> to vector<8x32x128xf32>
    %28 = arith.mulf %27, %4 : vector<8x32x128xf32>
    %cst_10 = arith.constant dense<0.000000e+00> : vector<8x128xf32>
    %29 = vector.multi_reduction <add>, %28, %cst_10 [1] : vector<8x32x128xf32> to vector<8x128xf32>
    %30 = tpu.concatenate %21, %25, %29 in 0 : vector<8x128xf32>, vector<8x128xf32>, vector<8x128xf32> -> vector<24x128xf32>
    %c0_11 = arith.constant 0 : index
    %c0_12 = arith.constant 0 : index
    %31 = vector.load %arg4[%c0_11, %c0_12] : memref<128x8xf32, #tpu.memory_space<vmem>>, vector<128x8xf32>
    %cst_13 = arith.constant dense<0.000000e+00> : vector<24x8xf32>
    %32 = tpu.matmul %30, %31, %cst_13 {dimension_numbers = #tpu.dot_dimension_numbers<[1], [0], [0], [1], [0, 0, 1, 1], [], []>} : vector<24x128xf32>, vector<128x8xf32>, vector<24x8xf32> -> vector<24x8xf32>
    %c0_14 = arith.constant 0 : index
    %c0_15 = arith.constant 0 : index
    %33 = vector.load %arg5[%c0_14, %c0_15] : memref<1x8xf32, #tpu.memory_space<vmem>>, vector<1x8xf32>
    %34 = vector.broadcast %33 : vector<1x8xf32> to vector<24x8xf32>
    %35 = arith.addf %32, %34 : vector<24x8xf32>
    %cst_16 = arith.constant 0.000000e+00 : f32
    %36 = vector.broadcast %cst_16 : f32 to vector<24x8xf32>
    %37 = arith.maximumf %35, %36 : vector<24x8xf32>
    %cst_17 = arith.constant 0.000000e+00 : f32
    %38 = vector.broadcast %cst_17 : f32 to vector<8x128xf32>
    %39 = vector.extract_strided_slice %37 {offsets = [0, 0], sizes = [8, 8], strides = [1, 1]} : vector<24x8xf32> to vector<8x8xf32>
    %c0_18 = arith.constant 0 : index
    %c0_19 = arith.constant 0 : index
    %40 = vector.load %arg6[%c0_18, %c0_19] : memref<24x128xf32, #tpu.memory_space<vmem>>, vector<8x128xf32>
    %cst_20 = arith.constant dense<0.000000e+00> : vector<8x128xf32>
    %41 = tpu.matmul %39, %40, %cst_20 {dimension_numbers = #tpu.dot_dimension_numbers<[1], [0], [0], [1], [0, 0, 1, 1], [], []>} : vector<8x8xf32>, vector<8x128xf32>, vector<8x128xf32> -> vector<8x128xf32>
    %42 = arith.addf %38, %41 : vector<8x128xf32>
    %43 = vector.extract_strided_slice %37 {offsets = [8, 0], sizes = [8, 8], strides = [1, 1]} : vector<24x8xf32> to vector<8x8xf32>
    %c8 = arith.constant 8 : index
    %c0_21 = arith.constant 0 : index
    %44 = vector.load %arg6[%c8, %c0_21] : memref<24x128xf32, #tpu.memory_space<vmem>>, vector<8x128xf32>
    %cst_22 = arith.constant dense<0.000000e+00> : vector<8x128xf32>
    %45 = tpu.matmul %43, %44, %cst_22 {dimension_numbers = #tpu.dot_dimension_numbers<[1], [0], [0], [1], [0, 0, 1, 1], [], []>} : vector<8x8xf32>, vector<8x128xf32>, vector<8x128xf32> -> vector<8x128xf32>
    %46 = arith.addf %42, %45 : vector<8x128xf32>
    %47 = vector.extract_strided_slice %37 {offsets = [16, 0], sizes = [8, 8], strides = [1, 1]} : vector<24x8xf32> to vector<8x8xf32>
    %c16 = arith.constant 16 : index
    %c0_23 = arith.constant 0 : index
    %48 = vector.load %arg6[%c16, %c0_23] : memref<24x128xf32, #tpu.memory_space<vmem>>, vector<8x128xf32>
    %cst_24 = arith.constant dense<0.000000e+00> : vector<8x128xf32>
    %49 = tpu.matmul %47, %48, %cst_24 {dimension_numbers = #tpu.dot_dimension_numbers<[1], [0], [0], [1], [0, 0, 1, 1], [], []>} : vector<8x8xf32>, vector<8x128xf32>, vector<8x128xf32> -> vector<8x128xf32>
    %50 = arith.addf %46, %49 : vector<8x128xf32>
    %c0_25 = arith.constant 0 : index
    %c0_26 = arith.constant 0 : index
    %51 = vector.load %arg7[%c0_25, %c0_26] : memref<1x128xf32, #tpu.memory_space<vmem>>, vector<1x128xf32>
    %52 = vector.broadcast %51 : vector<1x128xf32> to vector<8x128xf32>
    %53 = arith.addf %50, %52 : vector<8x128xf32>
    %c0_27 = arith.constant 0 : index
    %c0_28 = arith.constant 0 : index
    %54 = vector.load %arg8[%c0_27, %c0_28] : memref<8x128xf32, #tpu.memory_space<vmem>>, vector<8x128xf32>
    tpu.vector_store %arg8[%c0_27, %c0_28], %53 {strides = array<i32>} : memref<8x128xf32, #tpu.memory_space<vmem>>, vector<8x128xf32>,
    return
  }
  func.func @transform_0(%arg0: i32) -> (i32, i32, i32) {
    %c0_i32 = arith.constant 0 : i32
    %c0_i32_0 = arith.constant 0 : i32
    %c0_i32_1 = arith.constant 0 : i32
    return %arg0, %c0_i32, %c0_i32_0 : i32, i32, i32
  }
  func.func @transform_1(%arg0: i32) -> (i32, i32) {
    %c0_i32 = arith.constant 0 : i32
    %c0_i32_0 = arith.constant 0 : i32
    %c0_i32_1 = arith.constant 0 : i32
    return %c0_i32, %c0_i32_0 : i32, i32
  }
  func.func @transform_2(%arg0: i32) -> (i32, i32) {
    %c0_i32 = arith.constant 0 : i32
    %c0_i32_0 = arith.constant 0 : i32
    %c0_i32_1 = arith.constant 0 : i32
    return %c0_i32, %c0_i32_0 : i32, i32
  }
  func.func @transform_3(%arg0: i32) -> (i32, i32) {
    %c0_i32 = arith.constant 0 : i32
    %c0_i32_0 = arith.constant 0 : i32
    %c0_i32_1 = arith.constant 0 : i32
    return %c0_i32, %c0_i32_0 : i32, i32
  }
  func.func @transform_4(%arg0: i32) -> (i32, i32) {
    %c0_i32 = arith.constant 0 : i32
    %c0_i32_0 = arith.constant 0 : i32
    %c0_i32_1 = arith.constant 0 : i32
    return %c0_i32, %c0_i32_0 : i32, i32
  }
  func.func @transform_5(%arg0: i32) -> (i32, i32) {
    %c0_i32 = arith.constant 0 : i32
    %c0_i32_0 = arith.constant 0 : i32
    %c0_i32_1 = arith.constant 0 : i32
    return %c0_i32, %c0_i32_0 : i32, i32
  }
  func.func @transform_6(%arg0: i32) -> (i32, i32) {
    %c0_i32 = arith.constant 0 : i32
    %c0_i32_0 = arith.constant 0 : i32
    %c0_i32_1 = arith.constant 0 : i32
    return %c0_i32, %c0_i32_0 : i32, i32
  }
  func.func @transform_7(%arg0: i32) -> (i32, i32) {
    %c0_i32 = arith.constant 0 : i32
    %c0_i32_0 = arith.constant 0 : i32
    return %arg0, %c0_i32 : i32, i32
  }
}

</mosaic_0001>

<llo_original>
// kernel: tpu_custom_call.1
$region0: #{tpu_custom_call.1}
  #allocation0 [shape = 'u32[]', space=smem, size = 0x4, offset = 0x4, fixed_abs, tag = 'smem constant byte address 0x4 - core index']
  #allocation1 [shape = 'u32[72,128]{1,0:T(1,128)}', space=vmem, size = 0x9000, scoped, tag = 'internal scratch']
  %s0 = inlined_call_operand.vmem [shape: f32[8,32,128], index: 0, kind: input, shape index: {}]
  %s1 = inlined_call_operand.hbm [shape: f32[32,128], index: 1, kind: input, shape index: {}]
  %s2 = inlined_call_operand.vmem [shape: f32[128,3], index: 2, kind: input, shape index: {}]
  %s3 = inlined_call_operand.vmem [shape: f32[128,8], index: 3, kind: input, shape index: {}]
  %s4 = inlined_call_operand.vmem [shape: f32[1,8], index: 4, kind: input, shape index: {}]
  %s5 = inlined_call_operand.hbm [shape: f32[24,128], index: 5, kind: input, shape index: {}]
  %s6 = inlined_call_operand.vmem [shape: f32[1,128], index: 6, kind: input, shape index: {}]
  %s7 = inlined_call_operand.hbm [shape: f32[8,128], index: 7, kind: output, shape index: {}]
  %s8 = sld [smem:[#allocation0]]
  $region46: #{tpu_custom_call.1} parent=0
    _
  %s10 = ssub.s32 1, %s8
  %s11 = scalar_select 0, %s10, %s8
  $region1: #{tpu_custom_call.1} parent=0
    #allocation2 [shape = 'u8[16384]{0}', space=vmem, size = 0x4000, scoped, tag = 'input window, operand 1, single buffered']
    #allocation3 [shape = 's32[1]{0}', space=sflag, size = 0x4, scoped, tag = 'scoped memory for tpu_custom_call.1']
    #allocation4 [shape = 's32[1]{0}', space=sflag, size = 0x4, scoped, tag = 'scoped memory for tpu_custom_call.1']
    #allocation5 [shape = 'u8[12288]{0}', space=vmem, size = 0x3000, scoped, tag = 'input window, operand 5, single buffered']
    #allocation6 [shape = 's32[1]{0}', space=sflag, size = 0x4, scoped, tag = 'scoped memory for tpu_custom_call.1']
    #allocation7 [shape = 'u8[4096]{0}', space=vmem, size = 0x1000, scoped, tag = 'output window, operand 0, single buffered']
    %12 = vsyncpa [#allocation3], 0
    %13 = vsyncpa [#allocation6], 0
    %14 = vsyncpa [#allocation4], 0
    // Predicated region
    $region2: #{tpu_custom_call.1} parent=1 // pred_check
      _
    $region3: #{tpu_custom_call.1} parent=1 // pred_check_branch
      %16 = sbr.rel (0) target = $region5
    $region4: #{tpu_custom_call.1} parent=1 // pred_region
      _
    $region5: #{tpu_custom_call.1} parent=1 // pred_fallthru
      _
    // Predicated region
    $region6: #{tpu_custom_call.1} parent=1 // pred_check
      _
    $region7: #{tpu_custom_call.1} parent=1 // pred_check_branch
      %18 = sbr.rel (0) target = $region9
    $region8: #{tpu_custom_call.1} parent=1 // pred_region
      %20 = vsyncadd [#allocation3], 0
      %s21 = sshll.u32 %s1, 4
      %s22 = int_to_ptr.hbm [resolvable:$true] %s21
      %s23 = sshll.u32 [#allocation2], 4
      %s24 = int_to_ptr.vmem [resolvable:$true] %s23
      %29 = dma.hbm_to_vmem [thread:$0]  %s22, 512, %s24, [#allocation3], 128, 128, 8
    $region9: #{tpu_custom_call.1} parent=1 // pred_fallthru
      _
    // Predicated region
    $region10: #{tpu_custom_call.1} parent=1 // pred_check
      _
    $region11: #{tpu_custom_call.1} parent=1 // pred_check_branch
      %31 = sbr.rel (0) target = $region13
    $region12: #{tpu_custom_call.1} parent=1 // pred_region
      _
    $region13: #{tpu_custom_call.1} parent=1 // pred_fallthru
      _
    // Predicated region
    $region14: #{tpu_custom_call.1} parent=1 // pred_check
      _
    $region15: #{tpu_custom_call.1} parent=1 // pred_check_branch
      %33 = sbr.rel (0) target = $region17
    $region16: #{tpu_custom_call.1} parent=1 // pred_region
      _
    $region17: #{tpu_custom_call.1} parent=1 // pred_fallthru
      _
    // Predicated region
    $region18: #{tpu_custom_call.1} parent=1 // pred_check
      _
    $region19: #{tpu_custom_call.1} parent=1 // pred_check_branch
      %35 = sbr.rel (0) target = $region21
    $region20: #{tpu_custom_call.1} parent=1 // pred_region
      _
    $region21: #{tpu_custom_call.1} parent=1 // pred_fallthru
      _
    // Predicated region
    $region22: #{tpu_custom_call.1} parent=1 // pred_check
      _
    $region23: #{tpu_custom_call.1} parent=1 // pred_check_branch
      %37 = sbr.rel (0) target = $region25
    $region24: #{tpu_custom_call.1} parent=1 // pred_region
      %39 = vsyncadd [#allocation6], 0
      %s40 = sshll.u32 %s5, 4
      %s41 = int_to_ptr.hbm [resolvable:$true] %s40
      %s42 = sshll.u32 [#allocation5], 4
      %s43 = int_to_ptr.vmem [resolvable:$true] %s42
      %48 = dma.hbm_to_vmem [thread:$0]  %s41, 384, %s43, [#allocation6], 128, 128, 8
    $region25: #{tpu_custom_call.1} parent=1 // pred_fallthru
      _
    // Predicated region
    $region26: #{tpu_custom_call.1} parent=1 // pred_check
      _
    $region27: #{tpu_custom_call.1} parent=1 // pred_check_branch
      %50 = sbr.rel (0) target = $region29
    $region28: #{tpu_custom_call.1} parent=1 // pred_region
      _
    $region29: #{tpu_custom_call.1} parent=1 // pred_fallthru
      _
    // Predicated region
    $region30: #{tpu_custom_call.1} parent=1 // pred_check
      _
    $region31: #{tpu_custom_call.1} parent=1 // pred_check_branch
      %52 = sbr.rel (0) target = $region33
    $region32: #{tpu_custom_call.1} parent=1 // pred_region
      %54 = dma.done [#allocation3], 512
    $region33: #{tpu_custom_call.1} parent=1 // pred_fallthru
      _
    // Predicated region
    $region34: #{tpu_custom_call.1} parent=1 // pred_check
      _
    $region35: #{tpu_custom_call.1} parent=1 // pred_check_branch
      %56 = sbr.rel (0) target = $region37
    $region36: #{tpu_custom_call.1} parent=1 // pred_region
      %58 = dma.done [#allocation6], 384
    $region37: #{tpu_custom_call.1} parent=1 // pred_fallthru
      _
    %v59 = vld [vmem:[%s0] sm:$0xff]
    %v60 = vld [vmem:[%s0 + $0x8] sm:$0xff]
    %v61 = vld [vmem:[%s0 + $0x10] sm:$0xff]
    %v62 = vld [vmem:[%s0 + $0x18] sm:$0xff]
    %v63 = vld [vmem:[%s0 + $0x20] sm:$0xff]
    %v64 = vld [vmem:[%s0 + $0x28] sm:$0xff]
    %v65 = vld [vmem:[%s0 + $0x30] sm:$0xff]
    %v66 = vld [vmem:[%s0 + $0x38] sm:$0xff]
    %v67 = vld [vmem:[%s0 + $0x40] sm:$0xff]
    %v68 = vld [vmem:[%s0 + $0x48] sm:$0xff]
    %v69 = vld [vmem:[%s0 + $0x50] sm:$0xff]
    %v70 = vld [vmem:[%s0 + $0x58] sm:$0xff]
    %v71 = vld [vmem:[%s0 + $0x60] sm:$0xff]
    %v72 = vld [vmem:[%s0 + $0x68] sm:$0xff]
    %v73 = vld [vmem:[%s0 + $0x70] sm:$0xff]
    %v74 = vld [vmem:[%s0 + $0x78] sm:$0xff]
    %v75 = vld [vmem:[%s0 + $0x80] sm:$0xff]
    %v76 = vld [vmem:[%s0 + $0x88] sm:$0xff]
    %v77 = vld [vmem:[%s0 + $0x90] sm:$0xff]
    %v78 = vld [vmem:[%s0 + $0x98] sm:$0xff]
    %v79 = vld [vmem:[%s0 + $0xa0] sm:$0xff]
    %v80 = vld [vmem:[%s0 + $0xa8] sm:$0xff]
    %v81 = vld [vmem:[%s0 + $0xb0] sm:$0xff]
    %v82 = vld [vmem:[%s0 + $0xb8] sm:$0xff]
    %v83 = vld [vmem:[%s0 + $0xc0] sm:$0xff]
    %v84 = vld [vmem:[%s0 + $0xc8] sm:$0xff]
    %v85 = vld [vmem:[%s0 + $0xd0] sm:$0xff]
    %v86 = vld [vmem:[%s0 + $0xd8] sm:$0xff]
    %v87 = vld [vmem:[%s0 + $0xe0] sm:$0xff]
    %v88 = vld [vmem:[%s0 + $0xe8] sm:$0xff]
    %v89 = vld [vmem:[%s0 + $0xf0] sm:$0xff]
    %v90 = vld [vmem:[%s0 + $0xf8] sm:$0xff]
    %v91 = vld [vmem:[#allocation2] sm:$0xff]
    %v92 = vld [vmem:[#allocation2 + $0x8] sm:$0xff]
    %v93 = vld [vmem:[#allocation2 + $0x10] sm:$0xff]
    %v94 = vld [vmem:[#allocation2 + $0x18] sm:$0xff]
    %v95 = vadd.f32 %v59, %v91
    %v96 = vadd.f32 %v60, %v92
    %v97 = vadd.f32 %v61, %v93
    %v98 = vadd.f32 %v62, %v94
    %v99 = vadd.f32 %v63, %v91
    %v100 = vadd.f32 %v64, %v92
    %v101 = vadd.f32 %v65, %v93
    %v102 = vadd.f32 %v66, %v94
    %v103 = vadd.f32 %v67, %v91
    %v104 = vadd.f32 %v68, %v92
    %v105 = vadd.f32 %v69, %v93
    %v106 = vadd.f32 %v70, %v94
    %v107 = vadd.f32 %v71, %v91
    %v108 = vadd.f32 %v72, %v92
    %v109 = vadd.f32 %v73, %v93
    %v110 = vadd.f32 %v74, %v94
    %v111 = vadd.f32 %v75, %v91
    %v112 = vadd.f32 %v76, %v92
    %v113 = vadd.f32 %v77, %v93
    %v114 = vadd.f32 %v78, %v94
    %v115 = vadd.f32 %v79, %v91
    %v116 = vadd.f32 %v80, %v92
    %v117 = vadd.f32 %v81, %v93
    %v118 = vadd.f32 %v82, %v94
    %v119 = vadd.f32 %v83, %v91
    %v120 = vadd.f32 %v84, %v92
    %v121 = vadd.f32 %v85, %v93
    %v122 = vadd.f32 %v86, %v94
    %v123 = vadd.f32 %v87, %v91
    %v124 = vadd.f32 %v88, %v92
    %v125 = vadd.f32 %v89, %v93
    %v126 = vadd.f32 %v90, %v94
    %v127 = vld [vmem:[%s2] sm:$0xff]
    %v128 = vld [vmem:[%s2 + $0x8] sm:$0xff]
    %v129 = vld [vmem:[%s2 + $0x10] sm:$0xff]
    %v130 = vld [vmem:[%s2 + $0x18] sm:$0xff]
    %v131 = vld [vmem:[%s2 + $0x20] sm:$0xff]
    %v132 = vld [vmem:[%s2 + $0x28] sm:$0xff]
    %v133 = vld [vmem:[%s2 + $0x30] sm:$0xff]
    %v134 = vld [vmem:[%s2 + $0x38] sm:$0xff]
    %v135 = vld [vmem:[%s2 + $0x40] sm:$0xff]
    %v136 = vld [vmem:[%s2 + $0x48] sm:$0xff]
    %v137 = vld [vmem:[%s2 + $0x50] sm:$0xff]
    %v138 = vld [vmem:[%s2 + $0x58] sm:$0xff]
    %v139 = vld [vmem:[%s2 + $0x60] sm:$0xff]
    %v140 = vld [vmem:[%s2 + $0x68] sm:$0xff]
    %v141 = vld [vmem:[%s2 + $0x70] sm:$0xff]
    %v142 = vld [vmem:[%s2 + $0x78] sm:$0xff]
    %143 = vmatpush.msra.mxu0 %v142
    %144 = vmatpush.msra.mxu0 %v141
    %145 = vmatpush.msra.mxu0 %v140
    %146 = vmatpush.msra.mxu0 %v139
    %147 = vmatpush.msra.mxu0 %v138
    %148 = vmatpush.msra.mxu0 %v137
    %149 = vmatpush.msra.mxu0 %v136
    %150 = vmatpush.msra.mxu0 %v135
    %151 = vmatpush.msra.mxu0 %v134
    %152 = vmatpush.msra.mxu0 %v133
    %153 = vmatpush.msra.mxu0 %v132
    %154 = vmatpush.msra.mxu0 %v131
    %155 = vmatpush.msra.mxu0 %v130
    %156 = vmatpush.msra.mxu0 %v129
    %157 = vmatpush.msra.mxu0 %v128
    %158 = vmatpush.msra.mxu0 %v127
    %159 = vmatmul.f32.gmra.mxu0 %v95
    %v160 = vpop.f32.mrf.mxu0
    %v161 = vadd.f32 0.0, %v160
    %162 = vmatmul.f32.gmra.mxu0 %v96
    %v163 = vpop.f32.mrf.mxu0
    %v164 = vadd.f32 0.0, %v163
    %165 = vmatmul.f32.gmra.mxu0 %v97
    %v166 = vpop.f32.mrf.mxu0
    %v167 = vadd.f32 0.0, %v166
    %168 = vmatmul.f32.gmra.mxu0 %v98
    %v169 = vpop.f32.mrf.mxu0
    %v170 = vadd.f32 0.0, %v169
    %171 = vmatmul.f32.gmra.mxu0 %v99
    %v172 = vpop.f32.mrf.mxu0
    %v173 = vadd.f32 0.0, %v172
    %174 = vmatmul.f32.gmra.mxu0 %v100
    %v175 = vpop.f32.mrf.mxu0
    %v176 = vadd.f32 0.0, %v175
    %177 = vmatmul.f32.gmra.mxu0 %v101
    %v178 = vpop.f32.mrf.mxu0
    %v179 = vadd.f32 0.0, %v178
    %180 = vmatmul.f32.gmra.mxu0 %v102
    %v181 = vpop.f32.mrf.mxu0
    %v182 = vadd.f32 0.0, %v181
    %183 = vmatmul.f32.gmra.mxu0 %v103
    %v184 = vpop.f32.mrf.mxu0
    %v185 = vadd.f32 0.0, %v184
    %186 = vmatmul.f32.gmra.mxu0 %v104
    %v187 = vpop.f32.mrf.mxu0
    %v188 = vadd.f32 0.0, %v187
    %189 = vmatmul.f32.gmra.mxu0 %v105
    %v190 = vpop.f32.mrf.mxu0
    %v191 = vadd.f32 0.0, %v190
    %192 = vmatmul.f32.gmra.mxu0 %v106
    %v193 = vpop.f32.mrf.mxu0
    %v194 = vadd.f32 0.0, %v193
    %195 = vmatmul.f32.gmra.mxu0 %v107
    %v196 = vpop.f32.mrf.mxu0
    %v197 = vadd.f32 0.0, %v196
    %198 = vmatmul.f32.gmra.mxu0 %v108
    %v199 = vpop.f32.mrf.mxu0
    %v200 = vadd.f32 0.0, %v199
    %201 = vmatmul.f32.gmra.mxu0 %v109
    %v202 = vpop.f32.mrf.mxu0
    %v203 = vadd.f32 0.0, %v202
    %204 = vmatmul.f32.gmra.mxu0 %v110
    %v205 = vpop.f32.mrf.mxu0
    %v206 = vadd.f32 0.0, %v205
    %207 = vmatmul.f32.gmra.mxu0 %v111
    %v208 = vpop.f32.mrf.mxu0
    %v209 = vadd.f32 0.0, %v208
    %210 = vmatmul.f32.gmra.mxu0 %v112
    %v211 = vpop.f32.mrf.mxu0
    %v212 = vadd.f32 0.0, %v211
    %213 = vmatmul.f32.gmra.mxu0 %v113
    %v214 = vpop.f32.mrf.mxu0
    %v215 = vadd.f32 0.0, %v214
    %216 = vmatmul.f32.gmra.mxu0 %v114
    %v217 = vpop.f32.mrf.mxu0
    %v218 = vadd.f32 0.0, %v217
    %219 = vmatmul.f32.gmra.mxu0 %v115
    %v220 = vpop.f32.mrf.mxu0
    %v221 = vadd.f32 0.0, %v220
    %222 = vmatmul.f32.gmra.mxu0 %v116
    %v223 = vpop.f32.mrf.mxu0
    %v224 = vadd.f32 0.0, %v223
    %225 = vmatmul.f32.gmra.mxu0 %v117
    %v226 = vpop.f32.mrf.mxu0
    %v227 = vadd.f32 0.0, %v226
    %228 = vmatmul.f32.gmra.mxu0 %v118
    %v229 = vpop.f32.mrf.mxu0
    %v230 = vadd.f32 0.0, %v229
    %231 = vmatmul.f32.gmra.mxu0 %v119
    %v232 = vpop.f32.mrf.mxu0
    %v233 = vadd.f32 0.0, %v232
    %234 = vmatmul.f32.gmra.mxu0 %v120
    %v235 = vpop.f32.mrf.mxu0
    %v236 = vadd.f32 0.0, %v235
    %237 = vmatmul.f32.gmra.mxu0 %v121
    %v238 = vpop.f32.mrf.mxu0
    %v239 = vadd.f32 0.0, %v238
    %240 = vmatmul.f32.gmra.mxu0 %v122
    %v241 = vpop.f32.mrf.mxu0
    %v242 = vadd.f32 0.0, %v241
    %243 = vmatmul.f32.gmra.mxu0 %v123
    %v244 = vpop.f32.mrf.mxu0
    %v245 = vadd.f32 0.0, %v244
    %246 = vmatmul.f32.gmra.mxu0 %v124
    %v247 = vpop.f32.mrf.mxu0
    %v248 = vadd.f32 0.0, %v247
    %249 = vmatmul.f32.gmra.mxu0 %v125
    %v250 = vpop.f32.mrf.mxu0
    %v251 = vadd.f32 0.0, %v250
    %252 = vmatmul.f32.gmra.mxu0 %v126
    %v253 = vpop.f32.mrf.mxu0
    %v254 = vadd.f32 0.0, %v253
    %255 = vdwg.mxu0
    %vm256 = vcmask 23552
    %v257 = vsel %vm256, %v161, -inf
    %v258 = vsel %vm256, %v164, -inf
    %v259 = vmax.f32 %v257, %v258
    %v260 = vsel %vm256, %v167, -inf
    %v261 = vmax.f32 %v259, %v260
    %v262 = vsel %vm256, %v170, -inf
    %v263 = vmax.f32 %v261, %v262
    %v264 = vrot.slane %v263, 4
    %v265 = vmax.f32 %v263, %v264
    %v266 = vrot.slane %v265, 2
    %v267 = vmax.f32 %v265, %v266
    %v268 = vrot.slane %v267, 1
    %v269 = vmax.f32 %v267, %v268
    %v270 = vsel %vm256, %v173, -inf
    %v271 = vsel %vm256, %v176, -inf
    %v272 = vmax.f32 %v270, %v271
    %v273 = vsel %vm256, %v179, -inf
    %v274 = vmax.f32 %v272, %v273
    %v275 = vsel %vm256, %v182, -inf
    %v276 = vmax.f32 %v274, %v275
    %v277 = vrot.slane %v276, 4
    %v278 = vmax.f32 %v276, %v277
    %v279 = vrot.slane %v278, 2
    %v280 = vmax.f32 %v278, %v279
    %v281 = vrot.slane %v280, 1
    %v282 = vmax.f32 %v280, %v281
    %v283 = vsel %vm256, %v185, -inf
    %v284 = vsel %vm256, %v188, -inf
    %v285 = vmax.f32 %v283, %v284
    %v286 = vsel %vm256, %v191, -inf
    %v287 = vmax.f32 %v285, %v286
    %v288 = vsel %vm256, %v194, -inf
    %v289 = vmax.f32 %v287, %v288
    %v290 = vrot.slane %v289, 4
    %v291 = vmax.f32 %v289, %v290
    %v292 = vrot.slane %v291, 2
    %v293 = vmax.f32 %v291, %v292
    %v294 = vrot.slane %v293, 1
    %v295 = vmax.f32 %v293, %v294
    %v296 = vsel %vm256, %v197, -inf
    %v297 = vsel %vm256, %v200, -inf
    %v298 = vmax.f32 %v296, %v297
    %v299 = vsel %vm256, %v203, -inf
    %v300 = vmax.f32 %v298, %v299
    %v301 = vsel %vm256, %v206, -inf
    %v302 = vmax.f32 %v300, %v301
    %v303 = vrot.slane %v302, 4
    %v304 = vmax.f32 %v302, %v303
    %v305 = vrot.slane %v304, 2
    %v306 = vmax.f32 %v304, %v305
    %v307 = vrot.slane %v306, 1
    %v308 = vmax.f32 %v306, %v307
    %v309 = vsel %vm256, %v209, -inf
    %v310 = vsel %vm256, %v212, -inf
    %v311 = vmax.f32 %v309, %v310
    %v312 = vsel %vm256, %v215, -inf
    %v313 = vmax.f32 %v311, %v312
    %v314 = vsel %vm256, %v218, -inf
    %v315 = vmax.f32 %v313, %v314
    %v316 = vrot.slane %v315, 4
    %v317 = vmax.f32 %v315, %v316
    %v318 = vrot.slane %v317, 2
    %v319 = vmax.f32 %v317, %v318
    %v320 = vrot.slane %v319, 1
    %v321 = vmax.f32 %v319, %v320
    %v322 = vsel %vm256, %v221, -inf
    %v323 = vsel %vm256, %v224, -inf
    %v324 = vmax.f32 %v322, %v323
    %v325 = vsel %vm256, %v227, -inf
    %v326 = vmax.f32 %v324, %v325
    %v327 = vsel %vm256, %v230, -inf
    %v328 = vmax.f32 %v326, %v327
    %v329 = vrot.slane %v328, 4
    %v330 = vmax.f32 %v328, %v329
    %v331 = vrot.slane %v330, 2
    %v332 = vmax.f32 %v330, %v331
    %v333 = vrot.slane %v332, 1
    %v334 = vmax.f32 %v332, %v333
    %v335 = vsel %vm256, %v233, -inf
    %v336 = vsel %vm256, %v236, -inf
    %v337 = vmax.f32 %v335, %v336
    %v338 = vsel %vm256, %v239, -inf
    %v339 = vmax.f32 %v337, %v338
    %v340 = vsel %vm256, %v242, -inf
    %v341 = vmax.f32 %v339, %v340
    %v342 = vrot.slane %v341, 4
    %v343 = vmax.f32 %v341, %v342
    %v344 = vrot.slane %v343, 2
    %v345 = vmax.f32 %v343, %v344
    %v346 = vrot.slane %v345, 1
    %v347 = vmax.f32 %v345, %v346
    %v348 = vsel %vm256, %v245, -inf
    %v349 = vsel %vm256, %v248, -inf
    %v350 = vmax.f32 %v348, %v349
    %v351 = vsel %vm256, %v251, -inf
    %v352 = vmax.f32 %v350, %v351
    %v353 = vsel %vm256, %v254, -inf
    %v354 = vmax.f32 %v352, %v353
    %v355 = vrot.slane %v354, 4
    %v356 = vmax.f32 %v354, %v355
    %v357 = vrot.slane %v356, 2
    %v358 = vmax.f32 %v356, %v357
    %v359 = vrot.slane %v358, 1
    %v360 = vmax.f32 %v358, %v359
    %v361 = vsub.f32 %v161, %v269
    %v362 = vsub.f32 %v164, %v269
    %v363 = vsub.f32 %v167, %v269
    %v364 = vsub.f32 %v170, %v269
    %v365 = vsub.f32 %v173, %v282
    %v366 = vsub.f32 %v176, %v282
    %v367 = vsub.f32 %v179, %v282
    %v368 = vsub.f32 %v182, %v282
    %v369 = vsub.f32 %v185, %v295
    %v370 = vsub.f32 %v188, %v295
    %v371 = vsub.f32 %v191, %v295
    %v372 = vsub.f32 %v194, %v295
    %v373 = vsub.f32 %v197, %v308
    %v374 = vsub.f32 %v200, %v308
    %v375 = vsub.f32 %v203, %v308
    %v376 = vsub.f32 %v206, %v308
    %v377 = vsub.f32 %v209, %v321
    %v378 = vsub.f32 %v212, %v321
    %v379 = vsub.f32 %v215, %v321
    %v380 = vsub.f32 %v218, %v321
    %v381 = vsub.f32 %v221, %v334
    %v382 = vsub.f32 %v224, %v334
    %v383 = vsub.f32 %v227, %v334
    %v384 = vsub.f32 %v230, %v334
    %v385 = vsub.f32 %v233, %v347
    %v386 = vsub.f32 %v236, %v347
    %v387 = vsub.f32 %v239, %v347
    %v388 = vsub.f32 %v242, %v347
    %v389 = vsub.f32 %v245, %v360
    %v390 = vsub.f32 %v248, %v360
    %v391 = vsub.f32 %v251, %v360
    %v392 = vsub.f32 %v254, %v360
    %v393 = vmul.f32 %v361, 1.442695
    %v394 = vpow.pop %v393
    %v395 = vmul.f32 %v362, 1.442695
    %v396 = vpow.pop %v395
    %v397 = vmul.f32 %v363, 1.442695
    %v398 = vpow.pop %v397
    %v399 = vmul.f32 %v364, 1.442695
    %v400 = vpow.pop %v399
    %v401 = vmul.f32 %v365, 1.442695
    %v402 = vpow.pop %v401
    %v403 = vmul.f32 %v366, 1.442695
    %v404 = vpow.pop %v403
    %v405 = vmul.f32 %v367, 1.442695
    %v406 = vpow.pop %v405
    %v407 = vmul.f32 %v368, 1.442695
    %v408 = vpow.pop %v407
    %v409 = vmul.f32 %v369, 1.442695
    %v410 = vpow.pop %v409
    %v411 = vmul.f32 %v370, 1.442695
    %v412 = vpow.pop %v411
    %v413 = vmul.f32 %v371, 1.442695
    %v414 = vpow.pop %v413
    %v415 = vmul.f32 %v372, 1.442695
    %v416 = vpow.pop %v415
    %v417 = vmul.f32 %v373, 1.442695
    %v418 = vpow.pop %v417
    %v419 = vmul.f32 %v374, 1.442695
    %v420 = vpow.pop %v419
    %v421 = vmul.f32 %v375, 1.442695
    %v422 = vpow.pop %v421
    %v423 = vmul.f32 %v376, 1.442695
    %v424 = vpow.pop %v423
    %v425 = vmul.f32 %v377, 1.442695
    %v426 = vpow.pop %v425
    %v427 = vmul.f32 %v378, 1.442695
    %v428 = vpow.pop %v427
    %v429 = vmul.f32 %v379, 1.442695
    %v430 = vpow.pop %v429
    %v431 = vmul.f32 %v380, 1.442695
    %v432 = vpow.pop %v431
    %v433 = vmul.f32 %v381, 1.442695
    %v434 = vpow.pop %v433
    %v435 = vmul.f32 %v382, 1.442695
    %v436 = vpow.pop %v435
    %v437 = vmul.f32 %v383, 1.442695
    %v438 = vpow.pop %v437
    %v439 = vmul.f32 %v384, 1.442695
    %v440 = vpow.pop %v439
    %v441 = vmul.f32 %v385, 1.442695
    %v442 = vpow.pop %v441
    %v443 = vmul.f32 %v386, 1.442695
    %v444 = vpow.pop %v443
    %v445 = vmul.f32 %v387, 1.442695
    %v446 = vpow.pop %v445
    %v447 = vmul.f32 %v388, 1.442695
    %v448 = vpow.pop %v447
    %v449 = vmul.f32 %v389, 1.442695
    %v450 = vpow.pop %v449
    %v451 = vmul.f32 %v390, 1.442695
    %v452 = vpow.pop %v451
    %v453 = vmul.f32 %v391, 1.442695
    %v454 = vpow.pop %v453
    %v455 = vmul.f32 %v392, 1.442695
    %v456 = vpow.pop %v455
    %v457 = vsel %vm256, %v394, 0.0
    %v458 = vsel %vm256, %v396, 0.0
    %v459 = vadd.f32 %v457, %v458
    %v460 = vsel %vm256, %v398, 0.0
    %v461 = vadd.f32 %v459, %v460
    %v462 = vsel %vm256, %v400, 0.0
    %v463 = vadd.f32 %v461, %v462
    %v464 = vrot.slane %v463, 4
    %v465 = vadd.f32 %v463, %v464
    %v466 = vrot.slane %v465, 2
    %v467 = vadd.f32 %v465, %v466
    %v468 = vrot.slane %v467, 1
    %v469 = vadd.f32 %v467, %v468
    %v470 = vsel %vm256, %v402, 0.0
    %v471 = vsel %vm256, %v404, 0.0
    %v472 = vadd.f32 %v470, %v471
    %v473 = vsel %vm256, %v406, 0.0
    %v474 = vadd.f32 %v472, %v473
    %v475 = vsel %vm256, %v408, 0.0
    %v476 = vadd.f32 %v474, %v475
    %v477 = vrot.slane %v476, 4
    %v478 = vadd.f32 %v476, %v477
    %v479 = vrot.slane %v478, 2
    %v480 = vadd.f32 %v478, %v479
    %v481 = vrot.slane %v480, 1
    %v482 = vadd.f32 %v480, %v481
    %v483 = vsel %vm256, %v410, 0.0
    %v484 = vsel %vm256, %v412, 0.0
    %v485 = vadd.f32 %v483, %v484
    %v486 = vsel %vm256, %v414, 0.0
    %v487 = vadd.f32 %v485, %v486
    %v488 = vsel %vm256, %v416, 0.0
    %v489 = vadd.f32 %v487, %v488
    %v490 = vrot.slane %v489, 4
    %v491 = vadd.f32 %v489, %v490
    %v492 = vrot.slane %v491, 2
    %v493 = vadd.f32 %v491, %v492
    %v494 = vrot.slane %v493, 1
    %v495 = vadd.f32 %v493, %v494
    %v496 = vsel %vm256, %v418, 0.0
    %v497 = vsel %vm256, %v420, 0.0
    %v498 = vadd.f32 %v496, %v497
    %v499 = vsel %vm256, %v422, 0.0
    %v500 = vadd.f32 %v498, %v499
    %v501 = vsel %vm256, %v424, 0.0
    %v502 = vadd.f32 %v500, %v501
    %v503 = vrot.slane %v502, 4
    %v504 = vadd.f32 %v502, %v503
    %v505 = vrot.slane %v504, 2
    %v506 = vadd.f32 %v504, %v505
    %v507 = vrot.slane %v506, 1
    %v508 = vadd.f32 %v506, %v507
    %v509 = vsel %vm256, %v426, 0.0
    %v510 = vsel %vm256, %v428, 0.0
    %v511 = vadd.f32 %v509, %v510
    %v512 = vsel %vm256, %v430, 0.0
    %v513 = vadd.f32 %v511, %v512
    %v514 = vsel %vm256, %v432, 0.0
    %v515 = vadd.f32 %v513, %v514
    %v516 = vrot.slane %v515, 4
    %v517 = vadd.f32 %v515, %v516
    %v518 = vrot.slane %v517, 2
    %v519 = vadd.f32 %v517, %v518
    %v520 = vrot.slane %v519, 1
    %v521 = vadd.f32 %v519, %v520
    %v522 = vsel %vm256, %v434, 0.0
    %v523 = vsel %vm256, %v436, 0.0
    %v524 = vadd.f32 %v522, %v523
    %v525 = vsel %vm256, %v438, 0.0
    %v526 = vadd.f32 %v524, %v525
    %v527 = vsel %vm256, %v440, 0.0
    %v528 = vadd.f32 %v526, %v527
    %v529 = vrot.slane %v528, 4
    %v530 = vadd.f32 %v528, %v529
    %v531 = vrot.slane %v530, 2
    %v532 = vadd.f32 %v530, %v531
    %v533 = vrot.slane %v532, 1
    %v534 = vadd.f32 %v532, %v533
    %v535 = vsel %vm256, %v442, 0.0
    %v536 = vsel %vm256, %v444, 0.0
    %v537 = vadd.f32 %v535, %v536
    %v538 = vsel %vm256, %v446, 0.0
    %v539 = vadd.f32 %v537, %v538
    %v540 = vsel %vm256, %v448, 0.0
    %v541 = vadd.f32 %v539, %v540
    %v542 = vrot.slane %v541, 4
    %v543 = vadd.f32 %v541, %v542
    %v544 = vrot.slane %v543, 2
    %v545 = vadd.f32 %v543, %v544
    %v546 = vrot.slane %v545, 1
    %v547 = vadd.f32 %v545, %v546
    %v548 = vsel %vm256, %v450, 0.0
    %v549 = vsel %vm256, %v452, 0.0
    %v550 = vadd.f32 %v548, %v549
    %v551 = vsel %vm256, %v454, 0.0
    %v552 = vadd.f32 %v550, %v551
    %v553 = vsel %vm256, %v456, 0.0
    %v554 = vadd.f32 %v552, %v553
    %v555 = vrot.slane %v554, 4
    %v556 = vadd.f32 %v554, %v555
    %v557 = vrot.slane %v556, 2
    %v558 = vadd.f32 %v556, %v557
    %v559 = vrot.slane %v558, 1
    %v560 = vadd.f32 %v558, %v559
    %v561 = vrcp.pop %v469
    %v562 = vmul.f32 %v469, %v561
    %v563 = vsub.f32 1.0, %v562
    %v564 = vmul.f32 %v561, %v563
    %v565 = vadd.f32 %v561, %v564
    %vm566 = vweird.f32 %v469
    %vm567 = vweird.f32 %v561
    %vm568 = vmor %vm566, %vm567
    %v569 = vsel %vm568, %v561, %v565
    %v570 = vand.u32 2147483647, %v469
    %vm571 = vcmp.eq.f32.partialorder %v570, 8.507059e+37
    %v572 = vand.u32 %v469, 2147483648
    %v573 = vor.u32 1.1754944e-38, %v572
    %v574 = vsel %vm571, %v573, %v569
    %v575 = vmul.f32 %v394, %v574
    %v576 = vmul.f32 %v396, %v574
    %v577 = vmul.f32 %v398, %v574
    %v578 = vmul.f32 %v400, %v574
    %v579 = vrcp.pop %v482
    %v580 = vmul.f32 %v482, %v579
    %v581 = vsub.f32 1.0, %v580
    %v582 = vmul.f32 %v579, %v581
    %v583 = vadd.f32 %v579, %v582
    %vm584 = vweird.f32 %v482
    %vm585 = vweird.f32 %v579
    %vm586 = vmor %vm584, %vm585
    %v587 = vsel %vm586, %v579, %v583
    %v588 = vand.u32 2147483647, %v482
    %vm589 = vcmp.eq.f32.partialorder %v588, 8.507059e+37
    %v590 = vand.u32 %v482, 2147483648
    %v591 = vor.u32 1.1754944e-38, %v590
    %v592 = vsel %vm589, %v591, %v587
    %v593 = vmul.f32 %v402, %v592
    %v594 = vmul.f32 %v404, %v592
    %v595 = vmul.f32 %v406, %v592
    %v596 = vmul.f32 %v408, %v592
    %v597 = vrcp.pop %v495
    %v598 = vmul.f32 %v495, %v597
    %v599 = vsub.f32 1.0, %v598
    %v600 = vmul.f32 %v597, %v599
    %v601 = vadd.f32 %v597, %v600
    %vm602 = vweird.f32 %v495
    %vm603 = vweird.f32 %v597
    %vm604 = vmor %vm602, %vm603
    %v605 = vsel %vm604, %v597, %v601
    %v606 = vand.u32 2147483647, %v495
    %vm607 = vcmp.eq.f32.partialorder %v606, 8.507059e+37
    %v608 = vand.u32 %v495, 2147483648
    %v609 = vor.u32 1.1754944e-38, %v608
    %v610 = vsel %vm607, %v609, %v605
    %v611 = vmul.f32 %v410, %v610
    %v612 = vmul.f32 %v412, %v610
    %v613 = vmul.f32 %v414, %v610
    %v614 = vmul.f32 %v416, %v610
    %v615 = vrcp.pop %v508
    %v616 = vmul.f32 %v508, %v615
    %v617 = vsub.f32 1.0, %v616
    %v618 = vmul.f32 %v615, %v617
    %v619 = vadd.f32 %v615, %v618
    %vm620 = vweird.f32 %v508
    %vm621 = vweird.f32 %v615
    %vm622 = vmor %vm620, %vm621
    %v623 = vsel %vm622, %v615, %v619
    %v624 = vand.u32 2147483647, %v508
    %vm625 = vcmp.eq.f32.partialorder %v624, 8.507059e+37
    %v626 = vand.u32 %v508, 2147483648
    %v627 = vor.u32 1.1754944e-38, %v626
    %v628 = vsel %vm625, %v627, %v623
    %v629 = vmul.f32 %v418, %v628
    %v630 = vmul.f32 %v420, %v628
    %v631 = vmul.f32 %v422, %v628
    %v632 = vmul.f32 %v424, %v628
    %v633 = vrcp.pop %v521
    %v634 = vmul.f32 %v521, %v633
    %v635 = vsub.f32 1.0, %v634
    %v636 = vmul.f32 %v633, %v635
    %v637 = vadd.f32 %v633, %v636
    %vm638 = vweird.f32 %v521
    %vm639 = vweird.f32 %v633
    %vm640 = vmor %vm638, %vm639
    %v641 = vsel %vm640, %v633, %v637
    %v642 = vand.u32 2147483647, %v521
    %vm643 = vcmp.eq.f32.partialorder %v642, 8.507059e+37
    %v644 = vand.u32 %v521, 2147483648
    %v645 = vor.u32 1.1754944e-38, %v644
    %v646 = vsel %vm643, %v645, %v641
    %v647 = vmul.f32 %v426, %v646
    %v648 = vmul.f32 %v428, %v646
    %v649 = vmul.f32 %v430, %v646
    %v650 = vmul.f32 %v432, %v646
    %v651 = vrcp.pop %v534
    %v652 = vmul.f32 %v534, %v651
    %v653 = vsub.f32 1.0, %v652
    %v654 = vmul.f32 %v651, %v653
    %v655 = vadd.f32 %v651, %v654
    %vm656 = vweird.f32 %v534
    %vm657 = vweird.f32 %v651
    %vm658 = vmor %vm656, %vm657
    %v659 = vsel %vm658, %v651, %v655
    %v660 = vand.u32 2147483647, %v534
    %vm661 = vcmp.eq.f32.partialorder %v660, 8.507059e+37
    %v662 = vand.u32 %v534, 2147483648
    %v663 = vor.u32 1.1754944e-38, %v662
    %v664 = vsel %vm661, %v663, %v659
    %v665 = vmul.f32 %v434, %v664
    %v666 = vmul.f32 %v436, %v664
    %v667 = vmul.f32 %v438, %v664
    %v668 = vmul.f32 %v440, %v664
    %v669 = vrcp.pop %v547
    %v670 = vmul.f32 %v547, %v669
    %v671 = vsub.f32 1.0, %v670
    %v672 = vmul.f32 %v669, %v671
    %v673 = vadd.f32 %v669, %v672
    %vm674 = vweird.f32 %v547
    %vm675 = vweird.f32 %v669
    %vm676 = vmor %vm674, %vm675
    %v677 = vsel %vm676, %v669, %v673
    %v678 = vand.u32 2147483647, %v547
    %vm679 = vcmp.eq.f32.partialorder %v678, 8.507059e+37
    %v680 = vand.u32 %v547, 2147483648
    %v681 = vor.u32 1.1754944e-38, %v680
    %v682 = vsel %vm679, %v681, %v677
    %v683 = vmul.f32 %v442, %v682
    %v684 = vmul.f32 %v444, %v682
    %v685 = vmul.f32 %v446, %v682
    %v686 = vmul.f32 %v448, %v682
    %v687 = vrcp.pop %v560
    %v688 = vmul.f32 %v560, %v687
    %v689 = vsub.f32 1.0, %v688
    %v690 = vmul.f32 %v687, %v689
    %v691 = vadd.f32 %v687, %v690
    %vm692 = vweird.f32 %v560
    %vm693 = vweird.f32 %v687
    %vm694 = vmor %vm692, %vm693
    %v695 = vsel %vm694, %v687, %v691
    %v696 = vand.u32 2147483647, %v560
    %vm697 = vcmp.eq.f32.partialorder %v696, 8.507059e+37
    %v698 = vand.u32 %v560, 2147483648
    %v699 = vor.u32 1.1754944e-38, %v698
    %v700 = vsel %vm697, %v699, %v695
    %v701 = vmul.f32 %v450, %v700
    %v702 = vmul.f32 %v452, %v700
    %v703 = vmul.f32 %v454, %v700
    %v704 = vmul.f32 %v456, %v700
    %706 = vset.pattern.permute.xlu0 0
    %707 = vperm.xlu0 %706, %v575
    %v708 = vpop.permute.xlu0 %707
    %711 = vset.pattern.permute.xlu0 0
    %712 = vperm.xlu0 %711, %v576
    %v713 = vpop.permute.xlu0 %712
    %716 = vset.pattern.permute.xlu0 0
    %717 = vperm.xlu0 %716, %v577
    %v718 = vpop.permute.xlu0 %717
    %721 = vset.pattern.permute.xlu0 0
    %722 = vperm.xlu0 %721, %v578
    %v723 = vpop.permute.xlu0 %722
    %726 = vset.pattern.permute.xlu0 0
    %727 = vperm.xlu0 %726, %v593
    %v728 = vpop.permute.xlu0 %727
    %731 = vset.pattern.permute.xlu0 0
    %732 = vperm.xlu0 %731, %v594
    %v733 = vpop.permute.xlu0 %732
    %736 = vset.pattern.permute.xlu0 0
    %737 = vperm.xlu0 %736, %v595
    %v738 = vpop.permute.xlu0 %737
    %741 = vset.pattern.permute.xlu0 0
    %742 = vperm.xlu0 %741, %v596
    %v743 = vpop.permute.xlu0 %742
    %746 = vset.pattern.permute.xlu0 0
    %747 = vperm.xlu0 %746, %v611
    %v748 = vpop.permute.xlu0 %747
    %751 = vset.pattern.permute.xlu0 0
    %752 = vperm.xlu0 %751, %v612
    %v753 = vpop.permute.xlu0 %752
    %756 = vset.pattern.permute.xlu0 0
    %757 = vperm.xlu0 %756, %v613
    %v758 = vpop.permute.xlu0 %757
    %761 = vset.pattern.permute.xlu0 0
    %762 = vperm.xlu0 %761, %v614
    %v763 = vpop.permute.xlu0 %762
    %766 = vset.pattern.permute.xlu0 0
    %767 = vperm.xlu0 %766, %v629
    %v768 = vpop.permute.xlu0 %767
    %771 = vset.pattern.permute.xlu0 0
    %772 = vperm.xlu0 %771, %v630
    %v773 = vpop.permute.xlu0 %772
    %776 = vset.pattern.permute.xlu0 0
    %777 = vperm.xlu0 %776, %v631
    %v778 = vpop.permute.xlu0 %777
    %781 = vset.pattern.permute.xlu0 0
    %782 = vperm.xlu0 %781, %v632
    %v783 = vpop.permute.xlu0 %782
    %786 = vset.pattern.permute.xlu0 0
    %787 = vperm.xlu0 %786, %v647
    %v788 = vpop.permute.xlu0 %787
    %791 = vset.pattern.permute.xlu0 0
    %792 = vperm.xlu0 %791, %v648
    %v793 = vpop.permute.xlu0 %792
    %796 = vset.pattern.permute.xlu0 0
    %797 = vperm.xlu0 %796, %v649
    %v798 = vpop.permute.xlu0 %797
    %801 = vset.pattern.permute.xlu0 0
    %802 = vperm.xlu0 %801, %v650
    %v803 = vpop.permute.xlu0 %802
    %806 = vset.pattern.permute.xlu0 0
    %807 = vperm.xlu0 %806, %v665
    %v808 = vpop.permute.xlu0 %807
    %811 = vset.pattern.permute.xlu0 0
    %812 = vperm.xlu0 %811, %v666
    %v813 = vpop.permute.xlu0 %812
    %816 = vset.pattern.permute.xlu0 0
    %817 = vperm.xlu0 %816, %v667
    %v818 = vpop.permute.xlu0 %817
    %821 = vset.pattern.permute.xlu0 0
    %822 = vperm.xlu0 %821, %v668
    %v823 = vpop.permute.xlu0 %822
    %826 = vset.pattern.permute.xlu0 0
    %827 = vperm.xlu0 %826, %v683
    %v828 = vpop.permute.xlu0 %827
    %831 = vset.pattern.permute.xlu0 0
    %832 = vperm.xlu0 %831, %v684
    %v833 = vpop.permute.xlu0 %832
    %836 = vset.pattern.permute.xlu0 0
    %837 = vperm.xlu0 %836, %v685
    %v838 = vpop.permute.xlu0 %837
    %841 = vset.pattern.permute.xlu0 0
    %842 = vperm.xlu0 %841, %v686
    %v843 = vpop.permute.xlu0 %842
    %846 = vset.pattern.permute.xlu0 0
    %847 = vperm.xlu0 %846, %v701
    %v848 = vpop.permute.xlu0 %847
    %851 = vset.pattern.permute.xlu0 0
    %852 = vperm.xlu0 %851, %v702
    %v853 = vpop.permute.xlu0 %852
    %856 = vset.pattern.permute.xlu0 0
    %857 = vperm.xlu0 %856, %v703
    %v858 = vpop.permute.xlu0 %857
    %861 = vset.pattern.permute.xlu0 0
    %862 = vperm.xlu0 %861, %v704
    %v863 = vpop.permute.xlu0 %862
    %v865 = vmul.f32 %v708, %v95
    %v866 = vmul.f32 %v713, %v96
    %v867 = vmul.f32 %v718, %v97
    %v868 = vmul.f32 %v723, %v98
    %v869 = vmul.f32 %v728, %v99
    %v870 = vmul.f32 %v733, %v100
    %v871 = vmul.f32 %v738, %v101
    %v872 = vmul.f32 %v743, %v102
    %v873 = vmul.f32 %v748, %v103
    %v874 = vmul.f32 %v753, %v104
    %v875 = vmul.f32 %v758, %v105
    %v876 = vmul.f32 %v763, %v106
    %v877 = vmul.f32 %v768, %v107
    %v878 = vmul.f32 %v773, %v108
    %v879 = vmul.f32 %v778, %v109
    %v880 = vmul.f32 %v783, %v110
    %v881 = vmul.f32 %v788, %v111
    %v882 = vmul.f32 %v793, %v112
    %v883 = vmul.f32 %v798, %v113
    %v884 = vmul.f32 %v803, %v114
    %v885 = vmul.f32 %v808, %v115
    %v886 = vmul.f32 %v813, %v116
    %v887 = vmul.f32 %v818, %v117
    %v888 = vmul.f32 %v823, %v118
    %v889 = vmul.f32 %v828, %v119
    %v890 = vmul.f32 %v833, %v120
    %v891 = vmul.f32 %v838, %v121
    %v892 = vmul.f32 %v843, %v122
    %v893 = vmul.f32 %v848, %v123
    %v894 = vmul.f32 %v853, %v124
    %v895 = vmul.f32 %v858, %v125
    %v896 = vmul.f32 %v863, %v126
    %v897 = vadd.f32 %v865, %v866
    %v898 = vadd.f32 %v897, %v867
    %v899 = vadd.f32 %v898, %v868
    %v900 = vrot.slane %v899, 4
    %v901 = vadd.f32 %v899, %v900
    %v902 = vrot.slane %v901, 2
    %v903 = vadd.f32 %v901, %v902
    %v904 = vrot.slane %v903, 1
    %v905 = vadd.f32 %v903, %v904
    %v906 = vadd.f32 %v869, %v870
    %v907 = vadd.f32 %v906, %v871
    %v908 = vadd.f32 %v907, %v872
    %v909 = vrot.slane %v908, 4
    %v910 = vadd.f32 %v908, %v909
    %v911 = vrot.slane %v910, 2
    %v912 = vadd.f32 %v910, %v911
    %v913 = vrot.slane %v912, 1
    %v914 = vadd.f32 %v912, %v913
    %v915 = vadd.f32 %v873, %v874
    %v916 = vadd.f32 %v915, %v875
    %v917 = vadd.f32 %v916, %v876
    %v918 = vrot.slane %v917, 4
    %v919 = vadd.f32 %v917, %v918
    %v920 = vrot.slane %v919, 2
    %v921 = vadd.f32 %v919, %v920
    %v922 = vrot.slane %v921, 1
    %v923 = vadd.f32 %v921, %v922
    %v924 = vadd.f32 %v877, %v878
    %v925 = vadd.f32 %v924, %v879
    %v926 = vadd.f32 %v925, %v880
    %v927 = vrot.slane %v926, 4
    %v928 = vadd.f32 %v926, %v927
    %v929 = vrot.slane %v928, 2
    %v930 = vadd.f32 %v928, %v929
    %v931 = vrot.slane %v930, 1
    %v932 = vadd.f32 %v930, %v931
    %v933 = vadd.f32 %v881, %v882
    %v934 = vadd.f32 %v933, %v883
    %v935 = vadd.f32 %v934, %v884
    %v936 = vrot.slane %v935, 4
    %v937 = vadd.f32 %v935, %v936
    %v938 = vrot.slane %v937, 2
    %v939 = vadd.f32 %v937, %v938
    %v940 = vrot.slane %v939, 1
    %v941 = vadd.f32 %v939, %v940
    %v942 = vadd.f32 %v885, %v886
    %v943 = vadd.f32 %v942, %v887
    %v944 = vadd.f32 %v943, %v888
    %v945 = vrot.slane %v944, 4
    %v946 = vadd.f32 %v944, %v945
    %v947 = vrot.slane %v946, 2
    %v948 = vadd.f32 %v946, %v947
    %v949 = vrot.slane %v948, 1
    %v950 = vadd.f32 %v948, %v949
    %v951 = vadd.f32 %v889, %v890
    %v952 = vadd.f32 %v951, %v891
    %v953 = vadd.f32 %v952, %v892
    %v954 = vrot.slane %v953, 4
    %v955 = vadd.f32 %v953, %v954
    %v956 = vrot.slane %v955, 2
    %v957 = vadd.f32 %v955, %v956
    %v958 = vrot.slane %v957, 1
    %v959 = vadd.f32 %v957, %v958
    %v960 = vadd.f32 %v893, %v894
    %v961 = vadd.f32 %v960, %v895
    %v962 = vadd.f32 %v961, %v896
    %v963 = vrot.slane %v962, 4
    %v964 = vadd.f32 %v962, %v963
    %v965 = vrot.slane %v964, 2
    %v966 = vadd.f32 %v964, %v965
    %v967 = vrot.slane %v966, 1
    %v968 = vadd.f32 %v966, %v967
    %969 = vset.pattern.permute.xlu0 1
    %970 = vperm.xlu0 %969, %v575
    %v971 = vpop.permute.xlu0 %970
    %973 = vset.pattern.permute.xlu0 1
    %974 = vperm.xlu0 %973, %v576
    %v975 = vpop.permute.xlu0 %974
    %977 = vset.pattern.permute.xlu0 1
    %978 = vperm.xlu0 %977, %v577
    %v979 = vpop.permute.xlu0 %978
    %981 = vset.pattern.permute.xlu0 1
    %982 = vperm.xlu0 %981, %v578
    %v983 = vpop.permute.xlu0 %982
    %985 = vset.pattern.permute.xlu0 1
    %986 = vperm.xlu0 %985, %v593
    %v987 = vpop.permute.xlu0 %986
    %989 = vset.pattern.permute.xlu0 1
    %990 = vperm.xlu0 %989, %v594
    %v991 = vpop.permute.xlu0 %990
    %993 = vset.pattern.permute.xlu0 1
    %994 = vperm.xlu0 %993, %v595
    %v995 = vpop.permute.xlu0 %994
    %997 = vset.pattern.permute.xlu0 1
    %998 = vperm.xlu0 %997, %v596
    %v999 = vpop.permute.xlu0 %998
    %1001 = vset.pattern.permute.xlu0 1
    %1002 = vperm.xlu0 %1001, %v611
    %v1003 = vpop.permute.xlu0 %1002
    %1005 = vset.pattern.permute.xlu0 1
    %1006 = vperm.xlu0 %1005, %v612
    %v1007 = vpop.permute.xlu0 %1006
    %1009 = vset.pattern.permute.xlu0 1
    %1010 = vperm.xlu0 %1009, %v613
    %v1011 = vpop.permute.xlu0 %1010
    %1013 = vset.pattern.permute.xlu0 1
    %1014 = vperm.xlu0 %1013, %v614
    %v1015 = vpop.permute.xlu0 %1014
    %1017 = vset.pattern.permute.xlu0 1
    %1018 = vperm.xlu0 %1017, %v629
    %v1019 = vpop.permute.xlu0 %1018
    %1021 = vset.pattern.permute.xlu0 1
    %1022 = vperm.xlu0 %1021, %v630
    %v1023 = vpop.permute.xlu0 %1022
    %1025 = vset.pattern.permute.xlu0 1
    %1026 = vperm.xlu0 %1025, %v631
    %v1027 = vpop.permute.xlu0 %1026
    %1029 = vset.pattern.permute.xlu0 1
    %1030 = vperm.xlu0 %1029, %v632
    %v1031 = vpop.permute.xlu0 %1030
    %1033 = vset.pattern.permute.xlu0 1
    %1034 = vperm.xlu0 %1033, %v647
    %v1035 = vpop.permute.xlu0 %1034
    %1037 = vset.pattern.permute.xlu0 1
    %1038 = vperm.xlu0 %1037, %v648
    %v1039 = vpop.permute.xlu0 %1038
    %1041 = vset.pattern.permute.xlu0 1
    %1042 = vperm.xlu0 %1041, %v649
    %v1043 = vpop.permute.xlu0 %1042
    %1045 = vset.pattern.permute.xlu0 1
    %1046 = vperm.xlu0 %1045, %v650
    %v1047 = vpop.permute.xlu0 %1046
    %1049 = vset.pattern.permute.xlu0 1
    %1050 = vperm.xlu0 %1049, %v665
    %v1051 = vpop.permute.xlu0 %1050
    %1053 = vset.pattern.permute.xlu0 1
    %1054 = vperm.xlu0 %1053, %v666
    %v1055 = vpop.permute.xlu0 %1054
    %1057 = vset.pattern.permute.xlu0 1
    %1058 = vperm.xlu0 %1057, %v667
    %v1059 = vpop.permute.xlu0 %1058
    %1061 = vset.pattern.permute.xlu0 1
    %1062 = vperm.xlu0 %1061, %v668
    %v1063 = vpop.permute.xlu0 %1062
    %1065 = vset.pattern.permute.xlu0 1
    %1066 = vperm.xlu0 %1065, %v683
    %v1067 = vpop.permute.xlu0 %1066
    %1069 = vset.pattern.permute.xlu0 1
    %1070 = vperm.xlu0 %1069, %v684
    %v1071 = vpop.permute.xlu0 %1070
    %1073 = vset.pattern.permute.xlu0 1
    %1074 = vperm.xlu0 %1073, %v685
    %v1075 = vpop.permute.xlu0 %1074
    %1077 = vset.pattern.permute.xlu0 1
    %1078 = vperm.xlu0 %1077, %v686
    %v1079 = vpop.permute.xlu0 %1078
    %1081 = vset.pattern.permute.xlu0 1
    %1082 = vperm.xlu0 %1081, %v701
    %v1083 = vpop.permute.xlu0 %1082
    %1085 = vset.pattern.permute.xlu0 1
    %1086 = vperm.xlu0 %1085, %v702
    %v1087 = vpop.permute.xlu0 %1086
    %1089 = vset.pattern.permute.xlu0 1
    %1090 = vperm.xlu0 %1089, %v703
    %v1091 = vpop.permute.xlu0 %1090
    %1093 = vset.pattern.permute.xlu0 1
    %1094 = vperm.xlu0 %1093, %v704
    %v1095 = vpop.permute.xlu0 %1094
    %v1097 = vmul.f32 %v971, %v95
    %v1098 = vmul.f32 %v975, %v96
    %v1099 = vmul.f32 %v979, %v97
    %v1100 = vmul.f32 %v983, %v98
    %v1101 = vmul.f32 %v987, %v99
    %v1102 = vmul.f32 %v991, %v100
    %v1103 = vmul.f32 %v995, %v101
    %v1104 = vmul.f32 %v999, %v102
    %v1105 = vmul.f32 %v1003, %v103
    %v1106 = vmul.f32 %v1007, %v104
    %v1107 = vmul.f32 %v1011, %v105
    %v1108 = vmul.f32 %v1015, %v106
    %v1109 = vmul.f32 %v1019, %v107
    %v1110 = vmul.f32 %v1023, %v108
    %v1111 = vmul.f32 %v1027, %v109
    %v1112 = vmul.f32 %v1031, %v110
    %v1113 = vmul.f32 %v1035, %v111
    %v1114 = vmul.f32 %v1039, %v112
    %v1115 = vmul.f32 %v1043, %v113
    %v1116 = vmul.f32 %v1047, %v114
    %v1117 = vmul.f32 %v1051, %v115
    %v1118 = vmul.f32 %v1055, %v116
    %v1119 = vmul.f32 %v1059, %v117
    %v1120 = vmul.f32 %v1063, %v118
    %v1121 = vmul.f32 %v1067, %v119
    %v1122 = vmul.f32 %v1071, %v120
    %v1123 = vmul.f32 %v1075, %v121
    %v1124 = vmul.f32 %v1079, %v122
    %v1125 = vmul.f32 %v1083, %v123
    %v1126 = vmul.f32 %v1087, %v124
    %v1127 = vmul.f32 %v1091, %v125
    %v1128 = vmul.f32 %v1095, %v126
    %v1129 = vadd.f32 %v1097, %v1098
    %v1130 = vadd.f32 %v1129, %v1099
    %v1131 = vadd.f32 %v1130, %v1100
    %v1132 = vrot.slane %v1131, 4
    %v1133 = vadd.f32 %v1131, %v1132
    %v1134 = vrot.slane %v1133, 2
    %v1135 = vadd.f32 %v1133, %v1134
    %v1136 = vrot.slane %v1135, 1
    %v1137 = vadd.f32 %v1135, %v1136
    %v1138 = vadd.f32 %v1101, %v1102
    %v1139 = vadd.f32 %v1138, %v1103
    %v1140 = vadd.f32 %v1139, %v1104
    %v1141 = vrot.slane %v1140, 4
    %v1142 = vadd.f32 %v1140, %v1141
    %v1143 = vrot.slane %v1142, 2
    %v1144 = vadd.f32 %v1142, %v1143
    %v1145 = vrot.slane %v1144, 1
    %v1146 = vadd.f32 %v1144, %v1145
    %v1147 = vadd.f32 %v1105, %v1106
    %v1148 = vadd.f32 %v1147, %v1107
    %v1149 = vadd.f32 %v1148, %v1108
    %v1150 = vrot.slane %v1149, 4
    %v1151 = vadd.f32 %v1149, %v1150
    %v1152 = vrot.slane %v1151, 2
    %v1153 = vadd.f32 %v1151, %v1152
    %v1154 = vrot.slane %v1153, 1
    %v1155 = vadd.f32 %v1153, %v1154
    %v1156 = vadd.f32 %v1109, %v1110
    %v1157 = vadd.f32 %v1156, %v1111
    %v1158 = vadd.f32 %v1157, %v1112
    %v1159 = vrot.slane %v1158, 4
    %v1160 = vadd.f32 %v1158, %v1159
    %v1161 = vrot.slane %v1160, 2
    %v1162 = vadd.f32 %v1160, %v1161
    %v1163 = vrot.slane %v1162, 1
    %v1164 = vadd.f32 %v1162, %v1163
    %v1165 = vadd.f32 %v1113, %v1114
    %v1166 = vadd.f32 %v1165, %v1115
    %v1167 = vadd.f32 %v1166, %v1116
    %v1168 = vrot.slane %v1167, 4
    %v1169 = vadd.f32 %v1167, %v1168
    %v1170 = vrot.slane %v1169, 2
    %v1171 = vadd.f32 %v1169, %v1170
    %v1172 = vrot.slane %v1171, 1
    %v1173 = vadd.f32 %v1171, %v1172
    %v1174 = vadd.f32 %v1117, %v1118
    %v1175 = vadd.f32 %v1174, %v1119
    %v1176 = vadd.f32 %v1175, %v1120
    %v1177 = vrot.slane %v1176, 4
    %v1178 = vadd.f32 %v1176, %v1177
    %v1179 = vrot.slane %v1178, 2
    %v1180 = vadd.f32 %v1178, %v1179
    %v1181 = vrot.slane %v1180, 1
    %v1182 = vadd.f32 %v1180, %v1181
    %v1183 = vadd.f32 %v1121, %v1122
    %v1184 = vadd.f32 %v1183, %v1123
    %v1185 = vadd.f32 %v1184, %v1124
    %v1186 = vrot.slane %v1185, 4
    %v1187 = vadd.f32 %v1185, %v1186
    %v1188 = vrot.slane %v1187, 2
    %v1189 = vadd.f32 %v1187, %v1188
    %v1190 = vrot.slane %v1189, 1
    %v1191 = vadd.f32 %v1189, %v1190
    %v1192 = vadd.f32 %v1125, %v1126
    %v1193 = vadd.f32 %v1192, %v1127
    %v1194 = vadd.f32 %v1193, %v1128
    %v1195 = vrot.slane %v1194, 4
    %v1196 = vadd.f32 %v1194, %v1195
    %v1197 = vrot.slane %v1196, 2
    %v1198 = vadd.f32 %v1196, %v1197
    %v1199 = vrot.slane %v1198, 1
    %v1200 = vadd.f32 %v1198, %v1199
    %1201 = vset.pattern.permute.xlu0 2
    %1202 = vperm.xlu0 %1201, %v575
    %v1203 = vpop.permute.xlu0 %1202
    %1205 = vset.pattern.permute.xlu0 2
    %1206 = vperm.xlu0 %1205, %v576
    %v1207 = vpop.permute.xlu0 %1206
    %1209 = vset.pattern.permute.xlu0 2
    %1210 = vperm.xlu0 %1209, %v577
    %v1211 = vpop.permute.xlu0 %1210
    %1213 = vset.pattern.permute.xlu0 2
    %1214 = vperm.xlu0 %1213, %v578
    %v1215 = vpop.permute.xlu0 %1214
    %1217 = vset.pattern.permute.xlu0 2
    %1218 = vperm.xlu0 %1217, %v593
    %v1219 = vpop.permute.xlu0 %1218
    %1221 = vset.pattern.permute.xlu0 2
    %1222 = vperm.xlu0 %1221, %v594
    %v1223 = vpop.permute.xlu0 %1222
    %1225 = vset.pattern.permute.xlu0 2
    %1226 = vperm.xlu0 %1225, %v595
    %v1227 = vpop.permute.xlu0 %1226
    %1229 = vset.pattern.permute.xlu0 2
    %1230 = vperm.xlu0 %1229, %v596
    %v1231 = vpop.permute.xlu0 %1230
    %1233 = vset.pattern.permute.xlu0 2
    %1234 = vperm.xlu0 %1233, %v611
    %v1235 = vpop.permute.xlu0 %1234
    %1237 = vset.pattern.permute.xlu0 2
    %1238 = vperm.xlu0 %1237, %v612
    %v1239 = vpop.permute.xlu0 %1238
    %1241 = vset.pattern.permute.xlu0 2
    %1242 = vperm.xlu0 %1241, %v613
    %v1243 = vpop.permute.xlu0 %1242
    %1245 = vset.pattern.permute.xlu0 2
    %1246 = vperm.xlu0 %1245, %v614
    %v1247 = vpop.permute.xlu0 %1246
    %1249 = vset.pattern.permute.xlu0 2
    %1250 = vperm.xlu0 %1249, %v629
    %v1251 = vpop.permute.xlu0 %1250
    %1253 = vset.pattern.permute.xlu0 2
    %1254 = vperm.xlu0 %1253, %v630
    %v1255 = vpop.permute.xlu0 %1254
    %1257 = vset.pattern.permute.xlu0 2
    %1258 = vperm.xlu0 %1257, %v631
    %v1259 = vpop.permute.xlu0 %1258
    %1261 = vset.pattern.permute.xlu0 2
    %1262 = vperm.xlu0 %1261, %v632
    %v1263 = vpop.permute.xlu0 %1262
    %1265 = vset.pattern.permute.xlu0 2
    %1266 = vperm.xlu0 %1265, %v647
    %v1267 = vpop.permute.xlu0 %1266
    %1269 = vset.pattern.permute.xlu0 2
    %1270 = vperm.xlu0 %1269, %v648
    %v1271 = vpop.permute.xlu0 %1270
    %1273 = vset.pattern.permute.xlu0 2
    %1274 = vperm.xlu0 %1273, %v649
    %v1275 = vpop.permute.xlu0 %1274
    %1277 = vset.pattern.permute.xlu0 2
    %1278 = vperm.xlu0 %1277, %v650
    %v1279 = vpop.permute.xlu0 %1278
    %1281 = vset.pattern.permute.xlu0 2
    %1282 = vperm.xlu0 %1281, %v665
    %v1283 = vpop.permute.xlu0 %1282
    %1285 = vset.pattern.permute.xlu0 2
    %1286 = vperm.xlu0 %1285, %v666
    %v1287 = vpop.permute.xlu0 %1286
    %1289 = vset.pattern.permute.xlu0 2
    %1290 = vperm.xlu0 %1289, %v667
    %v1291 = vpop.permute.xlu0 %1290
    %1293 = vset.pattern.permute.xlu0 2
    %1294 = vperm.xlu0 %1293, %v668
    %v1295 = vpop.permute.xlu0 %1294
    %1297 = vset.pattern.permute.xlu0 2
    %1298 = vperm.xlu0 %1297, %v683
    %v1299 = vpop.permute.xlu0 %1298
    %1301 = vset.pattern.permute.xlu0 2
    %1302 = vperm.xlu0 %1301, %v684
    %v1303 = vpop.permute.xlu0 %1302
    %1305 = vset.pattern.permute.xlu0 2
    %1306 = vperm.xlu0 %1305, %v685
    %v1307 = vpop.permute.xlu0 %1306
    %1309 = vset.pattern.permute.xlu0 2
    %1310 = vperm.xlu0 %1309, %v686
    %v1311 = vpop.permute.xlu0 %1310
    %1313 = vset.pattern.permute.xlu0 2
    %1314 = vperm.xlu0 %1313, %v701
    %v1315 = vpop.permute.xlu0 %1314
    %1317 = vset.pattern.permute.xlu0 2
    %1318 = vperm.xlu0 %1317, %v702
    %v1319 = vpop.permute.xlu0 %1318
    %1321 = vset.pattern.permute.xlu0 2
    %1322 = vperm.xlu0 %1321, %v703
    %v1323 = vpop.permute.xlu0 %1322
    %1325 = vset.pattern.permute.xlu0 2
    %1326 = vperm.xlu0 %1325, %v704
    %v1327 = vpop.permute.xlu0 %1326
    %v1329 = vmul.f32 %v1203, %v95
    %v1330 = vmul.f32 %v1207, %v96
    %v1331 = vmul.f32 %v1211, %v97
    %v1332 = vmul.f32 %v1215, %v98
    %v1333 = vmul.f32 %v1219, %v99
    %v1334 = vmul.f32 %v1223, %v100
    %v1335 = vmul.f32 %v1227, %v101
    %v1336 = vmul.f32 %v1231, %v102
    %v1337 = vmul.f32 %v1235, %v103
    %v1338 = vmul.f32 %v1239, %v104
    %v1339 = vmul.f32 %v1243, %v105
    %v1340 = vmul.f32 %v1247, %v106
    %v1341 = vmul.f32 %v1251, %v107
    %v1342 = vmul.f32 %v1255, %v108
    %v1343 = vmul.f32 %v1259, %v109
    %v1344 = vmul.f32 %v1263, %v110
    %v1345 = vmul.f32 %v1267, %v111
    %v1346 = vmul.f32 %v1271, %v112
    %v1347 = vmul.f32 %v1275, %v113
    %v1348 = vmul.f32 %v1279, %v114
    %v1349 = vmul.f32 %v1283, %v115
    %v1350 = vmul.f32 %v1287, %v116
    %v1351 = vmul.f32 %v1291, %v117
    %v1352 = vmul.f32 %v1295, %v118
    %v1353 = vmul.f32 %v1299, %v119
    %v1354 = vmul.f32 %v1303, %v120
    %v1355 = vmul.f32 %v1307, %v121
    %v1356 = vmul.f32 %v1311, %v122
    %v1357 = vmul.f32 %v1315, %v123
    %v1358 = vmul.f32 %v1319, %v124
    %v1359 = vmul.f32 %v1323, %v125
    %v1360 = vmul.f32 %v1327, %v126
    %v1361 = vadd.f32 %v1329, %v1330
    %v1362 = vadd.f32 %v1361, %v1331
    %v1363 = vadd.f32 %v1362, %v1332
    %v1364 = vrot.slane %v1363, 4
    %v1365 = vadd.f32 %v1363, %v1364
    %v1366 = vrot.slane %v1365, 2
    %v1367 = vadd.f32 %v1365, %v1366
    %v1368 = vrot.slane %v1367, 1
    %v1369 = vadd.f32 %v1367, %v1368
    %v1370 = vadd.f32 %v1333, %v1334
    %v1371 = vadd.f32 %v1370, %v1335
    %v1372 = vadd.f32 %v1371, %v1336
    %v1373 = vrot.slane %v1372, 4
    %v1374 = vadd.f32 %v1372, %v1373
    %v1375 = vrot.slane %v1374, 2
    %v1376 = vadd.f32 %v1374, %v1375
    %v1377 = vrot.slane %v1376, 1
    %v1378 = vadd.f32 %v1376, %v1377
    %v1379 = vadd.f32 %v1337, %v1338
    %v1380 = vadd.f32 %v1379, %v1339
    %v1381 = vadd.f32 %v1380, %v1340
    %v1382 = vrot.slane %v1381, 4
    %v1383 = vadd.f32 %v1381, %v1382
    %v1384 = vrot.slane %v1383, 2
    %v1385 = vadd.f32 %v1383, %v1384
    %v1386 = vrot.slane %v1385, 1
    %v1387 = vadd.f32 %v1385, %v1386
    %v1388 = vadd.f32 %v1341, %v1342
    %v1389 = vadd.f32 %v1388, %v1343
    %v1390 = vadd.f32 %v1389, %v1344
    %v1391 = vrot.slane %v1390, 4
    %v1392 = vadd.f32 %v1390, %v1391
    %v1393 = vrot.slane %v1392, 2
    %v1394 = vadd.f32 %v1392, %v1393
    %v1395 = vrot.slane %v1394, 1
    %v1396 = vadd.f32 %v1394, %v1395
    %v1397 = vadd.f32 %v1345, %v1346
    %v1398 = vadd.f32 %v1397, %v1347
    %v1399 = vadd.f32 %v1398, %v1348
    %v1400 = vrot.slane %v1399, 4
    %v1401 = vadd.f32 %v1399, %v1400
    %v1402 = vrot.slane %v1401, 2
    %v1403 = vadd.f32 %v1401, %v1402
    %v1404 = vrot.slane %v1403, 1
    %v1405 = vadd.f32 %v1403, %v1404
    %v1406 = vadd.f32 %v1349, %v1350
    %v1407 = vadd.f32 %v1406, %v1351
    %v1408 = vadd.f32 %v1407, %v1352
    %v1409 = vrot.slane %v1408, 4
    %v1410 = vadd.f32 %v1408, %v1409
    %v1411 = vrot.slane %v1410, 2
    %v1412 = vadd.f32 %v1410, %v1411
    %v1413 = vrot.slane %v1412, 1
    %v1414 = vadd.f32 %v1412, %v1413
    %v1415 = vadd.f32 %v1353, %v1354
    %v1416 = vadd.f32 %v1415, %v1355
    %v1417 = vadd.f32 %v1416, %v1356
    %v1418 = vrot.slane %v1417, 4
    %v1419 = vadd.f32 %v1417, %v1418
    %v1420 = vrot.slane %v1419, 2
    %v1421 = vadd.f32 %v1419, %v1420
    %v1422 = vrot.slane %v1421, 1
    %v1423 = vadd.f32 %v1421, %v1422
    %v1424 = vadd.f32 %v1357, %v1358
    %v1425 = vadd.f32 %v1424, %v1359
    %v1426 = vadd.f32 %v1425, %v1360
    %v1427 = vrot.slane %v1426, 4
    %v1428 = vadd.f32 %v1426, %v1427
    %v1429 = vrot.slane %v1428, 2
    %v1430 = vadd.f32 %v1428, %v1429
    %v1431 = vrot.slane %v1430, 1
    %v1432 = vadd.f32 %v1430, %v1431
    %vm1441 = vcmask 1041409
    %v1442 = vsel %vm1441, %v914, %v905
    %vm1443 = vcmask 1042434
    %v1444 = vsel %vm1443, %v923, %v1442
    %vm1445 = vcmask 1043459
    %v1446 = vsel %vm1445, %v932, %v1444
    %vm1447 = vcmask 1044484
    %v1448 = vsel %vm1447, %v941, %v1446
    %vm1449 = vcmask 1045509
    %v1450 = vsel %vm1449, %v950, %v1448
    %vm1451 = vcmask 1046534
    %v1452 = vsel %vm1451, %v959, %v1450
    %vm1453 = vcmask 1047559
    %v1454 = vsel %vm1453, %v968, %v1452
    %v1464 = vsel %vm1441, %v1146, %v1137
    %v1465 = vsel %vm1443, %v1155, %v1464
    %v1466 = vsel %vm1445, %v1164, %v1465
    %v1467 = vsel %vm1447, %v1173, %v1466
    %v1468 = vsel %vm1449, %v1182, %v1467
    %v1469 = vsel %vm1451, %v1191, %v1468
    %v1470 = vsel %vm1453, %v1200, %v1469
    %v1480 = vsel %vm1441, %v1378, %v1369
    %v1481 = vsel %vm1443, %v1387, %v1480
    %v1482 = vsel %vm1445, %v1396, %v1481
    %v1483 = vsel %vm1447, %v1405, %v1482
    %v1484 = vsel %vm1449, %v1414, %v1483
    %v1485 = vsel %vm1451, %v1423, %v1484
    %v1486 = vsel %vm1453, %v1432, %v1485
    %v1488 = vld [vmem:[%s3] sm:$0xff]
    %v1489 = vld [vmem:[%s3 + $0x8] sm:$0xff]
    %v1490 = vld [vmem:[%s3 + $0x10] sm:$0xff]
    %v1491 = vld [vmem:[%s3 + $0x18] sm:$0xff]
    %v1492 = vld [vmem:[%s3 + $0x20] sm:$0xff]
    %v1493 = vld [vmem:[%s3 + $0x28] sm:$0xff]
    %v1494 = vld [vmem:[%s3 + $0x30] sm:$0xff]
    %v1495 = vld [vmem:[%s3 + $0x38] sm:$0xff]
    %v1496 = vld [vmem:[%s3 + $0x40] sm:$0xff]
    %v1497 = vld [vmem:[%s3 + $0x48] sm:$0xff]
    %v1498 = vld [vmem:[%s3 + $0x50] sm:$0xff]
    %v1499 = vld [vmem:[%s3 + $0x58] sm:$0xff]
    %v1500 = vld [vmem:[%s3 + $0x60] sm:$0xff]
    %v1501 = vld [vmem:[%s3 + $0x68] sm:$0xff]
    %v1502 = vld [vmem:[%s3 + $0x70] sm:$0xff]
    %v1503 = vld [vmem:[%s3 + $0x78] sm:$0xff]
    %v1504 = vld [vmem:[%s4] sm:$0x1]
    %v1506 = vperm.slane %v1504, 0
    %1508 = vmatpush.msra.mxu0 %v1503
    %1509 = vmatpush.msra.mxu0 %v1502
    %1510 = vmatpush.msra.mxu0 %v1501
    %1511 = vmatpush.msra.mxu0 %v1500
    %1512 = vmatpush.msra.mxu0 %v1499
    %1513 = vmatpush.msra.mxu0 %v1498
    %1514 = vmatpush.msra.mxu0 %v1497
    %1515 = vmatpush.msra.mxu0 %v1496
    %1516 = vmatpush.msra.mxu0 %v1495
    %1517 = vmatpush.msra.mxu0 %v1494
    %1518 = vmatpush.msra.mxu0 %v1493
    %1519 = vmatpush.msra.mxu0 %v1492
    %1520 = vmatpush.msra.mxu0 %v1491
    %1521 = vmatpush.msra.mxu0 %v1490
    %1522 = vmatpush.msra.mxu0 %v1489
    %1523 = vmatpush.msra.mxu0 %v1488
    %1524 = vmatmul.f32.gmra.mxu0 %v1454
    %v1525 = vpop.f32.mrf.mxu0
    %v1526 = vadd.f32 %v1506, %v1525
    %1527 = vmatmul.f32.gmra.mxu0 %v1470
    %v1528 = vpop.f32.mrf.mxu0
    %v1529 = vadd.f32 %v1506, %v1528
    %1530 = vmatmul.f32.gmra.mxu0 %v1486
    %v1531 = vpop.f32.mrf.mxu0
    %v1532 = vadd.f32 %v1506, %v1531
    %1533 = vdwg.mxu0
    %v1534 = vmax.f32 %v1526, 0.0
    %v1535 = vmax.f32 %v1529, 0.0
    %v1536 = vmax.f32 %v1532, 0.0
    %v1537 = vld [vmem:[#allocation5] sm:$0xff]
    %v1538 = vld [vmem:[#allocation5 + $0x8] sm:$0xff]
    %vm1539 = vcmask 64512
    %v1541 = vsel %vm1539, %v1535, 0
    %1543 = vmatpush.msra.mxu0 0.0
    %1544 = vmatpush.msra.mxu0 0.0
    %1545 = vmatpush.msra.mxu0 0.0
    %1546 = vmatpush.msra.mxu0 0.0
    %1547 = vmatpush.msra.mxu0 0.0
    %1548 = vmatpush.msra.mxu0 0.0
    %1549 = vmatpush.msra.mxu0 0.0
    %1550 = vmatpush.msra.mxu0 0.0
    %1551 = vmatpush.msra.mxu0 0.0
    %1552 = vmatpush.msra.mxu0 0.0
    %1553 = vmatpush.msra.mxu0 0.0
    %1554 = vmatpush.msra.mxu0 0.0
    %1555 = vmatpush.msra.mxu0 0.0
    %1556 = vmatpush.msra.mxu0 0.0
    %1557 = vmatpush.msra.mxu0 0.0
    %1558 = vmatpush.msra.mxu0 %v1538
    %1559 = vmatmul.f32.gmra.mxu0 %v1541
    %v1560 = vpop.f32.mrf.mxu0
    %v1561 = vadd.f32 0.0, %v1560
    %1562 = vdwg.mxu0
    %v1564 = vsel %vm1539, %v1534, 0
    %1566 = vmatpush.msra.mxu0 0.0
    %1567 = vmatpush.msra.mxu0 0.0
    %1568 = vmatpush.msra.mxu0 0.0
    %1569 = vmatpush.msra.mxu0 0.0
    %1570 = vmatpush.msra.mxu0 0.0
    %1571 = vmatpush.msra.mxu0 0.0
    %1572 = vmatpush.msra.mxu0 0.0
    %1573 = vmatpush.msra.mxu0 0.0
    %1574 = vmatpush.msra.mxu0 0.0
    %1575 = vmatpush.msra.mxu0 0.0
    %1576 = vmatpush.msra.mxu0 0.0
    %1577 = vmatpush.msra.mxu0 0.0
    %1578 = vmatpush.msra.mxu0 0.0
    %1579 = vmatpush.msra.mxu0 0.0
    %1580 = vmatpush.msra.mxu0 0.0
    %1581 = vmatpush.msra.mxu0 %v1537
    %1582 = vmatmul.f32.gmra.mxu0 %v1564
    %v1583 = vpop.f32.mrf.mxu0
    %v1584 = vadd.f32 %v1561, %v1583
    %1585 = vdwg.mxu0
    %v1586 = vld [vmem:[#allocation5 + $0x10] sm:$0xff]
    %v1588 = vsel %vm1539, %v1536, 0
    %1590 = vmatpush.msra.mxu0 0.0
    %1591 = vmatpush.msra.mxu0 0.0
    %1592 = vmatpush.msra.mxu0 0.0
    %1593 = vmatpush.msra.mxu0 0.0
    %1594 = vmatpush.msra.mxu0 0.0
    %1595 = vmatpush.msra.mxu0 0.0
    %1596 = vmatpush.msra.mxu0 0.0
    %1597 = vmatpush.msra.mxu0 0.0
    %1598 = vmatpush.msra.mxu0 0.0
    %1599 = vmatpush.msra.mxu0 0.0
    %1600 = vmatpush.msra.mxu0 0.0
    %1601 = vmatpush.msra.mxu0 0.0
    %1602 = vmatpush.msra.mxu0 0.0
    %1603 = vmatpush.msra.mxu0 0.0
    %1604 = vmatpush.msra.mxu0 0.0
    %1605 = vmatpush.msra.mxu0 %v1586
    %1606 = vmatmul.f32.gmra.mxu0 %v1588
    %v1607 = vpop.f32.mrf.mxu0
    %v1608 = vadd.f32 0.0, %v1607
    %1609 = vdwg.mxu0
    %v1610 = vadd.f32 %v1584, %v1608
    %v1611 = vld [vmem:[%s6] sm:$0x1]
    %v1613 = vperm.slane %v1611, 0
    %v1615 = vadd.f32 %v1610, %v1613
    %1616 = vst [vmem:[#allocation7] sm:$0xff] %v1615
    // Predicated region
    $region38: #{tpu_custom_call.1} parent=1 // pred_check
      _
    $region39: #{tpu_custom_call.1} parent=1 // pred_check_branch
      %1618 = sbr.rel (0) target = $region41
    $region40: #{tpu_custom_call.1} parent=1 // pred_region
      %1620 = vsyncadd [#allocation4], 0
      %s1622 = sshll.u32 [#allocation7], 4
      %s1623 = int_to_ptr.vmem [resolvable:$true] %s1622
      %s1624 = sshll.u32 %s7, 4
      %s1625 = int_to_ptr.hbm [resolvable:$true] %s1624
      %1627 = dma.vmem_to_hbm [thread:$0]  %s1623, 128, %s1625, [#allocation4]
    $region41: #{tpu_custom_call.1} parent=1 // pred_fallthru
      _
    // Predicated region
    $region42: #{tpu_custom_call.1} parent=1 // pred_check
      _
    $region43: #{tpu_custom_call.1} parent=1 // pred_check_branch
      %1629 = sbr.rel (0) target = $region45
    $region44: #{tpu_custom_call.1} parent=1 // pred_region
      %1631 = dma.done [#allocation4], 128
    $region45: #{tpu_custom_call.1} parent=1 // pred_fallthru
      _
    %1632 = vsyncpa [#allocation3], 1
    %1633 = vsyncpa [#allocation6], 1
    %1634 = vsyncpa [#allocation4], 1

</llo_original>
